<compile_context>
chip_gen: v5e
topology: v5e:2x2
jax: 0.10.0
libtpu: 0.0.40
codegen_flags: <defaults>
</compile_context>

<pallas_src>
import functools

import numpy as np

import jax
import jax.numpy as jnp
from jax.experimental import pallas as pl
from jax.experimental.pallas import tpu as pltpu


# ---------------------------------------------------------------------------
# Static SINDy library structure (shared by kernel, wrapper and reference).
# Order: [1] + [z_i] + [z_i z_j, i<=j] + [z_i z_j z_k, i<=j<=k] + [sin(z_i)]
# ---------------------------------------------------------------------------
def _poly_terms(latent_dim, poly_order):
    terms = [()]
    for i in range(latent_dim):
        terms.append((i,))
    if poly_order > 1:
        for i in range(latent_dim):
            for j in range(i, latent_dim):
                terms.append((i, j))
    if poly_order > 2:
        for i in range(latent_dim):
            for j in range(i, latent_dim):
                for k in range(j, latent_dim):
                    terms.append((i, j, k))
    return terms


def _library_dim(latent_dim, poly_order, include_sine):
    return len(_poly_terms(latent_dim, poly_order)) + (
        latent_dim if include_sine else 0)


def _round_up(x, m):
    return (x + m - 1) // m * m


def _selection_matrices(latent_dim, poly_order):
    """0/1 factor-selection matrices for degree-2 / degree-3 library terms."""
    quad, cub = [], []
    if poly_order > 1:
        for i in range(latent_dim):
            for j in range(i, latent_dim):
                quad.append((i, j))
    if poly_order > 2:
        for i in range(latent_dim):
            for j in range(i, latent_dim):
                for k in range(j, latent_dim):
                    cub.append((i, j, k))

    def onehot(rows, which):
        m = np.zeros((len(rows), latent_dim), np.float32)
        for t, idx in enumerate(rows):
            m[t, idx[which]] = 1.0
        return m

    sel2 = None
    if quad:
        sel2 = np.stack([onehot(quad, 0), onehot(quad, 1)], axis=0)       # (2, n2, L)
    sel3 = None
    if cub:
        sel3 = np.stack([onehot(cub, 0), onehot(cub, 1), onehot(cub, 2)],
                        axis=0)                                            # (3, n3, L)
    return sel2, sel3


# ---------------------------------------------------------------------------
# Pallas kernel.
# ---------------------------------------------------------------------------
def _e_sindy_kernel(*refs, latent_dim, include_sine, n_quad, n_cub,
                    sub_d, group_rows):
    """One D-tile.

    refs (in order):
      cm_ref  : (R, L, lib) f32   -- coefficients * mask * dt, lib-last layout
      sel2_ref: (2, n_quad, L)    -- only if n_quad > 0
      sel3_ref: (3, n_cub,  L)    -- only if n_cub  > 0
      h_ref   : (R, L, block_d)
      out_ref : (R, L, block_d)
    """
    idx = 0
    cm_ref = refs[idx]; idx += 1
    sel2_ref = None
    sel3_ref = None
    if n_quad:
        sel2_ref = refs[idx]; idx += 1
    if n_cub:
        sel3_ref = refs[idx]; idx += 1
    h_ref = refs[idx]; idx += 1
    out_ref = refs[idx]

    num_rep = h_ref.shape[0]
    block_d = h_ref.shape[2]
    L = latent_dim
    f32 = jnp.float32

    lin_off = 1
    quad_off = 1 + L
    cub_off = quad_off + n_quad
    sin_off = cub_off + n_cub

    # Walk the DMA tile in <=sub_d lane sub-tiles to bound the vreg footprint.
    for d0 in range(0, block_d, sub_d):
        dw = min(sub_d, block_d - d0)
        for r in range(num_rep):
            z = h_ref[r, :, d0:d0 + dw].astype(f32)                       # (L, dw)

            # constant term: lane-broadcast of cm[:, 0].
            acc = jnp.broadcast_to(cm_ref[r, :, 0:1], (L, dw))

            # linear terms: one small (L, L) @ (L, dw) MXU matmul.
            acc = acc + jnp.dot(cm_ref[r, :, lin_off:lin_off + L], z,
                                preferred_element_type=f32)

            # quadratic terms z_i * z_j: factor rows gathered via 0/1
            # selection matmuls (idle MXU) -> dense (gw, dw) block, no
            # per-row stores, then one contraction matmul per group.
            for g0 in range(0, n_quad, group_rows):
                gw = min(group_rows, n_quad - g0)
                left = jnp.dot(sel2_ref[0, g0:g0 + gw, :], z,
                               preferred_element_type=f32)
                right = jnp.dot(sel2_ref[1, g0:g0 + gw, :], z,
                                preferred_element_type=f32)
                acc = acc + jnp.dot(
                    cm_ref[r, :, quad_off + g0:quad_off + g0 + gw],
                    left * right, preferred_element_type=f32)

            # cubic terms z_i * z_j * z_k (same scheme, three factors).
            for g0 in range(0, n_cub, group_rows):
                gw = min(group_rows, n_cub - g0)
                fa = jnp.dot(sel3_ref[0, g0:g0 + gw, :], z,
                             preferred_element_type=f32)
                fb = jnp.dot(sel3_ref[1, g0:g0 + gw, :], z,
                             preferred_element_type=f32)
                fc = jnp.dot(sel3_ref[2, g0:g0 + gw, :], z,
                             preferred_element_type=f32)
                acc = acc + jnp.dot(
                    cm_ref[r, :, cub_off + g0:cub_off + g0 + gw],
                    fa * fb * fc, preferred_element_type=f32)

            # sine terms: sin(z) on the EUP, one contraction matmul.
            if include_sine:
                acc = acc + jnp.dot(cm_ref[r, :, sin_off:sin_off + L],
                                    jnp.sin(z), preferred_element_type=f32)

            out_ref[r, :, d0:d0 + dw] = (z + acc).astype(out_ref.dtype)


# ---------------------------------------------------------------------------
# Tiling choice: block_d divides d_pad, both multiples of 128.
# ---------------------------------------------------------------------------
def _choose_tiling(num_data, target_lanes=2048, min_tiles=2, max_waste=0.125):
    d128 = _round_up(max(num_data, 1), 128)
    n = d128 // 128
    cap = min(max(target_lanes // 128, 1), n)
    if n >= min_tiles:                       # keep >=2 tiles for v7x megacore
        cap = min(cap, max(n // min_tiles, 1))
    best_div = max(m for m in range(1, cap + 1) if n % m == 0)
    padded_n = _round_up(n, cap)
    waste = (padded_n - n) / padded_n
    if best_div < cap and waste <= max_waste:
        return padded_n * 128, cap * 128     # small extra pad, big tiles
    return n * 128, best_div * 128           # exact divisor, no block padding


# ---------------------------------------------------------------------------
# Wrapper: layout plumbing + pallas_call.
# ---------------------------------------------------------------------------
def e_sindy_forward(h_replicates, dt, coefficients, coefficient_mask,
                    poly_order, include_sine, *, target_block_d=2048,
                    sub_d=512):
    """Pallas implementation of E_SINDy.forward (h: (num_data, R, L))."""
    num_data, num_replicates, latent_dim = h_replicates.shape
    library_dim = coefficients.shape[1]
    assert library_dim == _library_dim(latent_dim, poly_order, include_sine)

    R, L = num_replicates, latent_dim
    n_quad = L * (L + 1) // 2 if poly_order > 1 else 0
    n_cub = L * (L + 1) * (L + 2) // 6 if poly_order > 2 else 0

    # Fold mask and dt into the coefficients once (tiny, wrapper-side).
    cm = (coefficients.astype(jnp.float32)
          * coefficient_mask.astype(jnp.float32)) * jnp.float32(dt)
    cm_t = jnp.transpose(cm, (0, 2, 1))                         # (R, L, lib)

    # Lane-dense layout: num_data on the lane axis.  Pure layout plumbing --
    # a caller that already keeps h as (R, L, D) avoids these copies.
    h_t = jnp.transpose(h_replicates, (1, 2, 0))                # (R, L, D)
    d_pad, block_d = _choose_tiling(num_data, target_lanes=target_block_d)
    if d_pad != num_data:
        h_t = jnp.pad(h_t, ((0, 0), (0, 0), (0, d_pad - num_data)))
    n_tiles = d_pad // block_d

    sel2_np, sel3_np = _selection_matrices(latent_dim, poly_order)

    inputs = [cm_t]
    in_specs = [pl.BlockSpec((R, L, library_dim), lambda d: (0, 0, 0))]
    if sel2_np is not None:
        inputs.append(jnp.asarray(sel2_np))
        in_specs.append(pl.BlockSpec((2, n_quad, L), lambda d: (0, 0, 0)))
    if sel3_np is not None:
        inputs.append(jnp.asarray(sel3_np))
        in_specs.append(pl.BlockSpec((3, n_cub, L), lambda d: (0, 0, 0)))
    inputs.append(h_t)
    in_specs.append(pl.BlockSpec((R, L, block_d), lambda d: (0, 0, d)))

    kernel = functools.partial(
        _e_sindy_kernel,
        latent_dim=latent_dim,
        include_sine=include_sine,
        n_quad=n_quad,
        n_cub=n_cub,
        sub_d=min(sub_d, block_d),
        group_rows=16,
    )

    out_t = pl.pallas_call(
        kernel,
        out_shape=jax.ShapeDtypeStruct((R, L, d_pad), h_replicates.dtype),
        grid=(n_tiles,),
        in_specs=in_specs,
        out_specs=pl.BlockSpec((R, L, block_d), lambda d: (0, 0, d)),
        compiler_params=pltpu.CompilerParams(
            dimension_semantics=("parallel",)),   # v7x: 2 TCs split the D axis
    )(*inputs)

    # Back to the module's (num_data, R, L) layout; drop padded columns
    # (padded columns hold the constant-term contribution -> must be sliced).
    return jnp.transpose(out_t, (2, 0, 1))[:num_data]


# ---------------------------------------------------------------------------
# Pure-JAX reference (mirrors the PyTorch forward exactly).
# ---------------------------------------------------------------------------
def _sindy_library_ref(z, latent_dim, poly_order, include_sine):
    n = z.shape[0]
    cols = [jnp.ones((n, 1), z.dtype)]
    for t in _poly_terms(latent_dim, poly_order)[1:]:
        c = z[:, t[0]:t[0] + 1]
        for ax in t[1:]:
            c = c * z[:, ax:ax + 1]
        cols.append(c)
    if include_sine:
        for i in range(latent_dim):
            cols.append(jnp.sin(z[:, i:i + 1]))
    return jnp.concatenate(cols, axis=1)


def e_sindy_forward_ref(h, dt, coef, mask, poly_order, include_sine):
    D, R, L = h.shape
    z = h.reshape(D * R, L)
    theta = _sindy_library_ref(z, L, poly_order, include_sine).reshape(D, R, -1)
    return h + jnp.einsum('ijk,jkl->ijl', theta, coef * mask) * dt


# TODO(synk): thresholding / add_noise / recenter are host-side parameter
# updates (no forward compute); they stay in plain JAX outside the kernel.

if __name__ == "__main__":
    dt = 0.01

    def run_case(key, num_data, num_replicates, latent_dim, poly_order,
                 include_sine, random_mask=False):
        library_dim = _library_dim(latent_dim, poly_order, include_sine)
        k_h, k_c, k_m = jax.random.split(key, 3)
        coefficients = 0.001 * jax.random.normal(
            k_c, (num_replicates, library_dim, latent_dim), jnp.float32)
        if random_mask:
            coefficient_mask = (jax.random.uniform(
                k_m, (num_replicates, library_dim, latent_dim)) > 0.3
                ).astype(jnp.float32)
        else:
            coefficient_mask = jnp.ones(
                (num_replicates, library_dim, latent_dim), jnp.float32)
        h = jax.random.normal(
            k_h, (num_data, num_replicates, latent_dim), jnp.float32)

        out = jax.block_until_ready(
            e_sindy_forward(h, dt, coefficients, coefficient_mask,
                            poly_order, include_sine))
        ref = e_sindy_forward_ref(h, dt, coefficients, coefficient_mask,
                                  poly_order, include_sine)
        assert out.shape == h.shape
        assert jnp.allclose(out, ref, atol=1e-5, rtol=1e-5), (
            f"mismatch (D={num_data}, L={latent_dim}, order={poly_order})")

    keys = jax.random.split(jax.random.PRNGKey(0), 3)
    # Case 1: tiny num_data -> single 128-lane tile.
    run_case(keys[0], 8, 4, 6, 2, True)
    # Case 2: D=700 -> padded to 768, 2 grid steps of 384 lanes (no block-
    # multiple padding), partially-zero mask exercises the cm fold.
    run_case(keys[1], 700, 4, 6, 2, True, random_mask=True)
    # Case 3: cubic library path (poly_order=3).
    run_case(keys[2], 50, 2, 3, 3, True)

    print("KERNEL_OK")
</pallas_src>

<mosaic_0001>
module attributes {stable_mosaic.version = 11 : i64} {
  func.func @_e_sindy_kernel(%arg0: i32, %arg1: memref<4x6x34xf32, #tpu.memory_space<vmem>>, %arg2: memref<2x21x6xf32, #tpu.memory_space<vmem>>, %arg3: memref<4x6x128xf32, #tpu.memory_space<vmem>>, %arg4: memref<4x6x128xf32, #tpu.memory_space<vmem>>) attributes {dimension_semantics = [#tpu.dimension_semantics<parallel>], iteration_bounds = array<i64: 1>, scalar_prefetch = 0 : i64, scratch_operands = 0 : i64, tpu.core_type = #tpu.core_type<tc>, window_params = [{pipeline_mode = #tpu.pipeline_mode<synchronous>, transform_indices = @transform_0, window_bounds = array<i64: 4, 6, 34>}, {pipeline_mode = #tpu.pipeline_mode<synchronous>, transform_indices = @transform_1, window_bounds = array<i64: 2, 21, 6>}, {transform_indices = @transform_2, window_bounds = array<i64: 4, 6, 128>}, {transform_indices = @transform_3, window_bounds = array<i64: 4, 6, 128>}]} {
    %c0 = arith.constant 0 : index
    %c0_0 = arith.constant 0 : index
    %c0_1 = arith.constant 0 : index
    %0 = vector.load %arg3[%c0, %c0_0, %c0_1] : memref<4x6x128xf32, #tpu.memory_space<vmem>>, vector<1x6x128xf32>
    %1 = vector.shape_cast %0 : vector<1x6x128xf32> to vector<6x128xf32>
    %c0_2 = arith.constant 0 : index
    %c0_3 = arith.constant 0 : index
    %c0_4 = arith.constant 0 : index
    %2 = vector.load %arg1[%c0_2, %c0_3, %c0_4] : memref<4x6x34xf32, #tpu.memory_space<vmem>>, vector<1x6x1xf32>
    %3 = vector.shape_cast %2 : vector<1x6x1xf32> to vector<6x1xf32>
    %4 = vector.shape_cast %3 : vector<6x1xf32> to vector<6x1xf32>
    %5 = vector.broadcast %4 : vector<6x1xf32> to vector<6x128xf32>
    %c0_5 = arith.constant 0 : index
    %c0_6 = arith.constant 0 : index
    %c1 = arith.constant 1 : index
    %6 = vector.load %arg1[%c0_5, %c0_6, %c1] : memref<4x6x34xf32, #tpu.memory_space<vmem>>, vector<1x6x6xf32>
    %7 = vector.shape_cast %6 : vector<1x6x6xf32> to vector<6x6xf32>
    %cst = arith.constant dense<0.000000e+00> : vector<6x128xf32>
    %8 = tpu.matmul %7, %1, %cst {dimension_numbers = #tpu.dot_dimension_numbers<[1], [0], [0], [1], [0, 0, 1, 1], [], []>} : vector<6x6xf32>, vector<6x128xf32>, vector<6x128xf32> -> vector<6x128xf32>
    %9 = arith.addf %5, %8 : vector<6x128xf32>
    %c0_7 = arith.constant 0 : index
    %c0_8 = arith.constant 0 : index
    %c0_9 = arith.constant 0 : index
    %10 = vector.load %arg2[%c0_7, %c0_8, %c0_9] : memref<2x21x6xf32, #tpu.memory_space<vmem>>, vector<1x16x6xf32>
    %11 = vector.shape_cast %10 : vector<1x16x6xf32> to vector<16x6xf32>
    %cst_10 = arith.constant dense<0.000000e+00> : vector<16x128xf32>
    %12 = tpu.matmul %11, %1, %cst_10 {dimension_numbers = #tpu.dot_dimension_numbers<[1], [0], [0], [1], [0, 0, 1, 1], [], []>} : vector<16x6xf32>, vector<6x128xf32>, vector<16x128xf32> -> vector<16x128xf32>
    %c1_11 = arith.constant 1 : index
    %c0_12 = arith.constant 0 : index
    %c0_13 = arith.constant 0 : index
    %13 = vector.load %arg2[%c1_11, %c0_12, %c0_13] : memref<2x21x6xf32, #tpu.memory_space<vmem>>, vector<1x16x6xf32>
    %14 = vector.shape_cast %13 : vector<1x16x6xf32> to vector<16x6xf32>
    %cst_14 = arith.constant dense<0.000000e+00> : vector<16x128xf32>
    %15 = tpu.matmul %14, %1, %cst_14 {dimension_numbers = #tpu.dot_dimension_numbers<[1], [0], [0], [1], [0, 0, 1, 1], [], []>} : vector<16x6xf32>, vector<6x128xf32>, vector<16x128xf32> -> vector<16x128xf32>
    %c0_15 = arith.constant 0 : index
    %c0_16 = arith.constant 0 : index
    %c7 = arith.constant 7 : index
    %16 = vector.load %arg1[%c0_15, %c0_16, %c7] : memref<4x6x34xf32, #tpu.memory_space<vmem>>, vector<1x6x16xf32>
    %17 = vector.shape_cast %16 : vector<1x6x16xf32> to vector<6x16xf32>
    %18 = arith.mulf %12, %15 : vector<16x128xf32>
    %cst_17 = arith.constant dense<0.000000e+00> : vector<6x128xf32>
    %19 = tpu.matmul %17, %18, %cst_17 {dimension_numbers = #tpu.dot_dimension_numbers<[1], [0], [0], [1], [0, 0, 1, 1], [], []>} : vector<6x16xf32>, vector<16x128xf32>, vector<6x128xf32> -> vector<6x128xf32>
    %20 = arith.addf %9, %19 : vector<6x128xf32>
    %c0_18 = arith.constant 0 : index
    %c16 = arith.constant 16 : index
    %c0_19 = arith.constant 0 : index
    %21 = vector.load %arg2[%c0_18, %c16, %c0_19] : memref<2x21x6xf32, #tpu.memory_space<vmem>>, vector<1x5x6xf32>
    %22 = vector.shape_cast %21 : vector<1x5x6xf32> to vector<5x6xf32>
    %cst_20 = arith.constant dense<0.000000e+00> : vector<5x128xf32>
    %23 = tpu.matmul %22, %1, %cst_20 {dimension_numbers = #tpu.dot_dimension_numbers<[1], [0], [0], [1], [0, 0, 1, 1], [], []>} : vector<5x6xf32>, vector<6x128xf32>, vector<5x128xf32> -> vector<5x128xf32>
    %c1_21 = arith.constant 1 : index
    %c16_22 = arith.constant 16 : index
    %c0_23 = arith.constant 0 : index
    %24 = vector.load %arg2[%c1_21, %c16_22, %c0_23] : memref<2x21x6xf32, #tpu.memory_space<vmem>>, vector<1x5x6xf32>
    %25 = vector.shape_cast %24 : vector<1x5x6xf32> to vector<5x6xf32>
    %cst_24 = arith.constant dense<0.000000e+00> : vector<5x128xf32>
    %26 = tpu.matmul %25, %1, %cst_24 {dimension_numbers = #tpu.dot_dimension_numbers<[1], [0], [0], [1], [0, 0, 1, 1], [], []>} : vector<5x6xf32>, vector<6x128xf32>, vector<5x128xf32> -> vector<5x128xf32>
    %c0_25 = arith.constant 0 : index
    %c0_26 = arith.constant 0 : index
    %c23 = arith.constant 23 : index
    %27 = vector.load %arg1[%c0_25, %c0_26, %c23] : memref<4x6x34xf32, #tpu.memory_space<vmem>>, vector<1x6x5xf32>
    %28 = vector.shape_cast %27 : vector<1x6x5xf32> to vector<6x5xf32>
    %29 = arith.mulf %23, %26 : vector<5x128xf32>
    %cst_27 = arith.constant dense<0.000000e+00> : vector<6x128xf32>
    %30 = tpu.matmul %28, %29, %cst_27 {dimension_numbers = #tpu.dot_dimension_numbers<[1], [0], [0], [1], [0, 0, 1, 1], [], []>} : vector<6x5xf32>, vector<5x128xf32>, vector<6x128xf32> -> vector<6x128xf32>
    %31 = arith.addf %20, %30 : vector<6x128xf32>
    %c0_28 = arith.constant 0 : index
    %c0_29 = arith.constant 0 : index
    %c28 = arith.constant 28 : index
    %32 = vector.load %arg1[%c0_28, %c0_29, %c28] : memref<4x6x34xf32, #tpu.memory_space<vmem>>, vector<1x6x6xf32>
    %33 = vector.shape_cast %32 : vector<1x6x6xf32> to vector<6x6xf32>
    %34 = math.sin %1 : vector<6x128xf32>
    %cst_30 = arith.constant dense<0.000000e+00> : vector<6x128xf32>
    %35 = tpu.matmul %33, %34, %cst_30 {dimension_numbers = #tpu.dot_dimension_numbers<[1], [0], [0], [1], [0, 0, 1, 1], [], []>} : vector<6x6xf32>, vector<6x128xf32>, vector<6x128xf32> -> vector<6x128xf32>
    %36 = arith.addf %31, %35 : vector<6x128xf32>
    %37 = arith.addf %1, %36 : vector<6x128xf32>
    %c0_31 = arith.constant 0 : index
    %c0_32 = arith.constant 0 : index
    %c0_33 = arith.constant 0 : index
    %38 = vector.load %arg4[%c0_31, %c0_32, %c0_33] : memref<4x6x128xf32, #tpu.memory_space<vmem>>, vector<1x6x128xf32>
    %39 = vector.shape_cast %38 : vector<1x6x128xf32> to vector<6x128xf32>
    %40 = vector.shape_cast %37 : vector<6x128xf32> to vector<1x6x128xf32>
    tpu.vector_store %arg4[%c0_31, %c0_32, %c0_33], %40 {strides = array<i32>} : memref<4x6x128xf32, #tpu.memory_space<vmem>>, vector<1x6x128xf32>,
    %c1_34 = arith.constant 1 : index
    %c0_35 = arith.constant 0 : index
    %c0_36 = arith.constant 0 : index
    %41 = vector.load %arg3[%c1_34, %c0_35, %c0_36] : memref<4x6x128xf32, #tpu.memory_space<vmem>>, vector<1x6x128xf32>
    %42 = vector.shape_cast %41 : vector<1x6x128xf32> to vector<6x128xf32>
    %c1_37 = arith.constant 1 : index
    %c0_38 = arith.constant 0 : index
    %c0_39 = arith.constant 0 : index
    %43 = vector.load %arg1[%c1_37, %c0_38, %c0_39] : memref<4x6x34xf32, #tpu.memory_space<vmem>>, vector<1x6x1xf32>
    %44 = vector.shape_cast %43 : vector<1x6x1xf32> to vector<6x1xf32>
    %45 = vector.shape_cast %44 : vector<6x1xf32> to vector<6x1xf32>
    %46 = vector.broadcast %45 : vector<6x1xf32> to vector<6x128xf32>
    %c1_40 = arith.constant 1 : index
    %c0_41 = arith.constant 0 : index
    %c1_42 = arith.constant 1 : index
    %47 = vector.load %arg1[%c1_40, %c0_41, %c1_42] : memref<4x6x34xf32, #tpu.memory_space<vmem>>, vector<1x6x6xf32>
    %48 = vector.shape_cast %47 : vector<1x6x6xf32> to vector<6x6xf32>
    %cst_43 = arith.constant dense<0.000000e+00> : vector<6x128xf32>
    %49 = tpu.matmul %48, %42, %cst_43 {dimension_numbers = #tpu.dot_dimension_numbers<[1], [0], [0], [1], [0, 0, 1, 1], [], []>} : vector<6x6xf32>, vector<6x128xf32>, vector<6x128xf32> -> vector<6x128xf32>
    %50 = arith.addf %46, %49 : vector<6x128xf32>
    %c0_44 = arith.constant 0 : index
    %c0_45 = arith.constant 0 : index
    %c0_46 = arith.constant 0 : index
    %51 = vector.load %arg2[%c0_44, %c0_45, %c0_46] : memref<2x21x6xf32, #tpu.memory_space<vmem>>, vector<1x16x6xf32>
    %52 = vector.shape_cast %51 : vector<1x16x6xf32> to vector<16x6xf32>
    %cst_47 = arith.constant dense<0.000000e+00> : vector<16x128xf32>
    %53 = tpu.matmul %52, %42, %cst_47 {dimension_numbers = #tpu.dot_dimension_numbers<[1], [0], [0], [1], [0, 0, 1, 1], [], []>} : vector<16x6xf32>, vector<6x128xf32>, vector<16x128xf32> -> vector<16x128xf32>
    %c1_48 = arith.constant 1 : index
    %c0_49 = arith.constant 0 : index
    %c0_50 = arith.constant 0 : index
    %54 = vector.load %arg2[%c1_48, %c0_49, %c0_50] : memref<2x21x6xf32, #tpu.memory_space<vmem>>, vector<1x16x6xf32>
    %55 = vector.shape_cast %54 : vector<1x16x6xf32> to vector<16x6xf32>
    %cst_51 = arith.constant dense<0.000000e+00> : vector<16x128xf32>
    %56 = tpu.matmul %55, %42, %cst_51 {dimension_numbers = #tpu.dot_dimension_numbers<[1], [0], [0], [1], [0, 0, 1, 1], [], []>} : vector<16x6xf32>, vector<6x128xf32>, vector<16x128xf32> -> vector<16x128xf32>
    %c1_52 = arith.constant 1 : index
    %c0_53 = arith.constant 0 : index
    %c7_54 = arith.constant 7 : index
    %57 = vector.load %arg1[%c1_52, %c0_53, %c7_54] : memref<4x6x34xf32, #tpu.memory_space<vmem>>, vector<1x6x16xf32>
    %58 = vector.shape_cast %57 : vector<1x6x16xf32> to vector<6x16xf32>
    %59 = arith.mulf %53, %56 : vector<16x128xf32>
    %cst_55 = arith.constant dense<0.000000e+00> : vector<6x128xf32>
    %60 = tpu.matmul %58, %59, %cst_55 {dimension_numbers = #tpu.dot_dimension_numbers<[1], [0], [0], [1], [0, 0, 1, 1], [], []>} : vector<6x16xf32>, vector<16x128xf32>, vector<6x128xf32> -> vector<6x128xf32>
    %61 = arith.addf %50, %60 : vector<6x128xf32>
    %c0_56 = arith.constant 0 : index
    %c16_57 = arith.constant 16 : index
    %c0_58 = arith.constant 0 : index
    %62 = vector.load %arg2[%c0_56, %c16_57, %c0_58] : memref<2x21x6xf32, #tpu.memory_space<vmem>>, vector<1x5x6xf32>
    %63 = vector.shape_cast %62 : vector<1x5x6xf32> to vector<5x6xf32>
    %cst_59 = arith.constant dense<0.000000e+00> : vector<5x128xf32>
    %64 = tpu.matmul %63, %42, %cst_59 {dimension_numbers = #tpu.dot_dimension_numbers<[1], [0], [0], [1], [0, 0, 1, 1], [], []>} : vector<5x6xf32>, vector<6x128xf32>, vector<5x128xf32> -> vector<5x128xf32>
    %c1_60 = arith.constant 1 : index
    %c16_61 = arith.constant 16 : index
    %c0_62 = arith.constant 0 : index
    %65 = vector.load %arg2[%c1_60, %c16_61, %c0_62] : memref<2x21x6xf32, #tpu.memory_space<vmem>>, vector<1x5x6xf32>
    %66 = vector.shape_cast %65 : vector<1x5x6xf32> to vector<5x6xf32>
    %cst_63 = arith.constant dense<0.000000e+00> : vector<5x128xf32>
    %67 = tpu.matmul %66, %42, %cst_63 {dimension_numbers = #tpu.dot_dimension_numbers<[1], [0], [0], [1], [0, 0, 1, 1], [], []>} : vector<5x6xf32>, vector<6x128xf32>, vector<5x128xf32> -> vector<5x128xf32>
    %c1_64 = arith.constant 1 : index
    %c0_65 = arith.constant 0 : index
    %c23_66 = arith.constant 23 : index
    %68 = vector.load %arg1[%c1_64, %c0_65, %c23_66] : memref<4x6x34xf32, #tpu.memory_space<vmem>>, vector<1x6x5xf32>
    %69 = vector.shape_cast %68 : vector<1x6x5xf32> to vector<6x5xf32>
    %70 = arith.mulf %64, %67 : vector<5x128xf32>
    %cst_67 = arith.constant dense<0.000000e+00> : vector<6x128xf32>
    %71 = tpu.matmul %69, %70, %cst_67 {dimension_numbers = #tpu.dot_dimension_numbers<[1], [0], [0], [1], [0, 0, 1, 1], [], []>} : vector<6x5xf32>, vector<5x128xf32>, vector<6x128xf32> -> vector<6x128xf32>
    %72 = arith.addf %61, %71 : vector<6x128xf32>
    %c1_68 = arith.constant 1 : index
    %c0_69 = arith.constant 0 : index
    %c28_70 = arith.constant 28 : index
    %73 = vector.load %arg1[%c1_68, %c0_69, %c28_70] : memref<4x6x34xf32, #tpu.memory_space<vmem>>, vector<1x6x6xf32>
    %74 = vector.shape_cast %73 : vector<1x6x6xf32> to vector<6x6xf32>
    %75 = math.sin %42 : vector<6x128xf32>
    %cst_71 = arith.constant dense<0.000000e+00> : vector<6x128xf32>
    %76 = tpu.matmul %74, %75, %cst_71 {dimension_numbers = #tpu.dot_dimension_numbers<[1], [0], [0], [1], [0, 0, 1, 1], [], []>} : vector<6x6xf32>, vector<6x128xf32>, vector<6x128xf32> -> vector<6x128xf32>
    %77 = arith.addf %72, %76 : vector<6x128xf32>
    %78 = arith.addf %42, %77 : vector<6x128xf32>
    %c1_72 = arith.constant 1 : index
    %c0_73 = arith.constant 0 : index
    %c0_74 = arith.constant 0 : index
    %79 = vector.load %arg4[%c1_72, %c0_73, %c0_74] : memref<4x6x128xf32, #tpu.memory_space<vmem>>, vector<1x6x128xf32>
    %80 = vector.shape_cast %79 : vector<1x6x128xf32> to vector<6x128xf32>
    %81 = vector.shape_cast %78 : vector<6x128xf32> to vector<1x6x128xf32>
    tpu.vector_store %arg4[%c1_72, %c0_73, %c0_74], %81 {strides = array<i32>} : memref<4x6x128xf32, #tpu.memory_space<vmem>>, vector<1x6x128xf32>,
    %c2 = arith.constant 2 : index
    %c0_75 = arith.constant 0 : index
    %c0_76 = arith.constant 0 : index
    %82 = vector.load %arg3[%c2, %c0_75, %c0_76] : memref<4x6x128xf32, #tpu.memory_space<vmem>>, vector<1x6x128xf32>
    %83 = vector.shape_cast %82 : vector<1x6x128xf32> to vector<6x128xf32>
    %c2_77 = arith.constant 2 : index
    %c0_78 = arith.constant 0 : index
    %c0_79 = arith.constant 0 : index
    %84 = vector.load %arg1[%c2_77, %c0_78, %c0_79] : memref<4x6x34xf32, #tpu.memory_space<vmem>>, vector<1x6x1xf32>
    %85 = vector.shape_cast %84 : vector<1x6x1xf32> to vector<6x1xf32>
    %86 = vector.shape_cast %85 : vector<6x1xf32> to vector<6x1xf32>
    %87 = vector.broadcast %86 : vector<6x1xf32> to vector<6x128xf32>
    %c2_80 = arith.constant 2 : index
    %c0_81 = arith.constant 0 : index
    %c1_82 = arith.constant 1 : index
    %88 = vector.load %arg1[%c2_80, %c0_81, %c1_82] : memref<4x6x34xf32, #tpu.memory_space<vmem>>, vector<1x6x6xf32>
    %89 = vector.shape_cast %88 : vector<1x6x6xf32> to vector<6x6xf32>
    %cst_83 = arith.constant dense<0.000000e+00> : vector<6x128xf32>
    %90 = tpu.matmul %89, %83, %cst_83 {dimension_numbers = #tpu.dot_dimension_numbers<[1], [0], [0], [1], [0, 0, 1, 1], [], []>} : vector<6x6xf32>, vector<6x128xf32>, vector<6x128xf32> -> vector<6x128xf32>
    %91 = arith.addf %87, %90 : vector<6x128xf32>
    %c0_84 = arith.constant 0 : index
    %c0_85 = arith.constant 0 : index
    %c0_86 = arith.constant 0 : index
    %92 = vector.load %arg2[%c0_84, %c0_85, %c0_86] : memref<2x21x6xf32, #tpu.memory_space<vmem>>, vector<1x16x6xf32>
    %93 = vector.shape_cast %92 : vector<1x16x6xf32> to vector<16x6xf32>
    %cst_87 = arith.constant dense<0.000000e+00> : vector<16x128xf32>
    %94 = tpu.matmul %93, %83, %cst_87 {dimension_numbers = #tpu.dot_dimension_numbers<[1], [0], [0], [1], [0, 0, 1, 1], [], []>} : vector<16x6xf32>, vector<6x128xf32>, vector<16x128xf32> -> vector<16x128xf32>
    %c1_88 = arith.constant 1 : index
    %c0_89 = arith.constant 0 : index
    %c0_90 = arith.constant 0 : index
    %95 = vector.load %arg2[%c1_88, %c0_89, %c0_90] : memref<2x21x6xf32, #tpu.memory_space<vmem>>, vector<1x16x6xf32>
    %96 = vector.shape_cast %95 : vector<1x16x6xf32> to vector<16x6xf32>
    %cst_91 = arith.constant dense<0.000000e+00> : vector<16x128xf32>
    %97 = tpu.matmul %96, %83, %cst_91 {dimension_numbers = #tpu.dot_dimension_numbers<[1], [0], [0], [1], [0, 0, 1, 1], [], []>} : vector<16x6xf32>, vector<6x128xf32>, vector<16x128xf32> -> vector<16x128xf32>
    %c2_92 = arith.constant 2 : index
    %c0_93 = arith.constant 0 : index
    %c7_94 = arith.constant 7 : index
    %98 = vector.load %arg1[%c2_92, %c0_93, %c7_94] : memref<4x6x34xf32, #tpu.memory_space<vmem>>, vector<1x6x16xf32>
    %99 = vector.shape_cast %98 : vector<1x6x16xf32> to vector<6x16xf32>
    %100 = arith.mulf %94, %97 : vector<16x128xf32>
    %cst_95 = arith.constant dense<0.000000e+00> : vector<6x128xf32>
    %101 = tpu.matmul %99, %100, %cst_95 {dimension_numbers = #tpu.dot_dimension_numbers<[1], [0], [0], [1], [0, 0, 1, 1], [], []>} : vector<6x16xf32>, vector<16x128xf32>, vector<6x128xf32> -> vector<6x128xf32>
    %102 = arith.addf %91, %101 : vector<6x128xf32>
    %c0_96 = arith.constant 0 : index
    %c16_97 = arith.constant 16 : index
    %c0_98 = arith.constant 0 : index
    %103 = vector.load %arg2[%c0_96, %c16_97, %c0_98] : memref<2x21x6xf32, #tpu.memory_space<vmem>>, vector<1x5x6xf32>
    %104 = vector.shape_cast %103 : vector<1x5x6xf32> to vector<5x6xf32>
    %cst_99 = arith.constant dense<0.000000e+00> : vector<5x128xf32>
    %105 = tpu.matmul %104, %83, %cst_99 {dimension_numbers = #tpu.dot_dimension_numbers<[1], [0], [0], [1], [0, 0, 1, 1], [], []>} : vector<5x6xf32>, vector<6x128xf32>, vector<5x128xf32> -> vector<5x128xf32>
    %c1_100 = arith.constant 1 : index
    %c16_101 = arith.constant 16 : index
    %c0_102 = arith.constant 0 : index
    %106 = vector.load %arg2[%c1_100, %c16_101, %c0_102] : memref<2x21x6xf32, #tpu.memory_space<vmem>>, vector<1x5x6xf32>
    %107 = vector.shape_cast %106 : vector<1x5x6xf32> to vector<5x6xf32>
    %cst_103 = arith.constant dense<0.000000e+00> : vector<5x128xf32>
    %108 = tpu.matmul %107, %83, %cst_103 {dimension_numbers = #tpu.dot_dimension_numbers<[1], [0], [0], [1], [0, 0, 1, 1], [], []>} : vector<5x6xf32>, vector<6x128xf32>, vector<5x128xf32> -> vector<5x128xf32>
    %c2_104 = arith.constant 2 : index
    %c0_105 = arith.constant 0 : index
    %c23_106 = arith.constant 23 : index
    %109 = vector.load %arg1[%c2_104, %c0_105, %c23_106] : memref<4x6x34xf32, #tpu.memory_space<vmem>>, vector<1x6x5xf32>
    %110 = vector.shape_cast %109 : vector<1x6x5xf32> to vector<6x5xf32>
    %111 = arith.mulf %105, %108 : vector<5x128xf32>
    %cst_107 = arith.constant dense<0.000000e+00> : vector<6x128xf32>
    %112 = tpu.matmul %110, %111, %cst_107 {dimension_numbers = #tpu.dot_dimension_numbers<[1], [0], [0], [1], [0, 0, 1, 1], [], []>} : vector<6x5xf32>, vector<5x128xf32>, vector<6x128xf32> -> vector<6x128xf32>
    %113 = arith.addf %102, %112 : vector<6x128xf32>
    %c2_108 = arith.constant 2 : index
    %c0_109 = arith.constant 0 : index
    %c28_110 = arith.constant 28 : index
    %114 = vector.load %arg1[%c2_108, %c0_109, %c28_110] : memref<4x6x34xf32, #tpu.memory_space<vmem>>, vector<1x6x6xf32>
    %115 = vector.shape_cast %114 : vector<1x6x6xf32> to vector<6x6xf32>
    %116 = math.sin %83 : vector<6x128xf32>
    %cst_111 = arith.constant dense<0.000000e+00> : vector<6x128xf32>
    %117 = tpu.matmul %115, %116, %cst_111 {dimension_numbers = #tpu.dot_dimension_numbers<[1], [0], [0], [1], [0, 0, 1, 1], [], []>} : vector<6x6xf32>, vector<6x128xf32>, vector<6x128xf32> -> vector<6x128xf32>
    %118 = arith.addf %113, %117 : vector<6x128xf32>
    %119 = arith.addf %83, %118 : vector<6x128xf32>
    %c2_112 = arith.constant 2 : index
    %c0_113 = arith.constant 0 : index
    %c0_114 = arith.constant 0 : index
    %120 = vector.load %arg4[%c2_112, %c0_113, %c0_114] : memref<4x6x128xf32, #tpu.memory_space<vmem>>, vector<1x6x128xf32>
    %121 = vector.shape_cast %120 : vector<1x6x128xf32> to vector<6x128xf32>
    %122 = vector.shape_cast %119 : vector<6x128xf32> to vector<1x6x128xf32>
    tpu.vector_store %arg4[%c2_112, %c0_113, %c0_114], %122 {strides = array<i32>} : memref<4x6x128xf32, #tpu.memory_space<vmem>>, vector<1x6x128xf32>,
    %c3 = arith.constant 3 : index
    %c0_115 = arith.constant 0 : index
    %c0_116 = arith.constant 0 : index
    %123 = vector.load %arg3[%c3, %c0_115, %c0_116] : memref<4x6x128xf32, #tpu.memory_space<vmem>>, vector<1x6x128xf32>
    %124 = vector.shape_cast %123 : vector<1x6x128xf32> to vector<6x128xf32>
    %c3_117 = arith.constant 3 : index
    %c0_118 = arith.constant 0 : index
    %c0_119 = arith.constant 0 : index
    %125 = vector.load %arg1[%c3_117, %c0_118, %c0_119] : memref<4x6x34xf32, #tpu.memory_space<vmem>>, vector<1x6x1xf32>
    %126 = vector.shape_cast %125 : vector<1x6x1xf32> to vector<6x1xf32>
    %127 = vector.shape_cast %126 : vector<6x1xf32> to vector<6x1xf32>
    %128 = vector.broadcast %127 : vector<6x1xf32> to vector<6x128xf32>
    %c3_120 = arith.constant 3 : index
    %c0_121 = arith.constant 0 : index
    %c1_122 = arith.constant 1 : index
    %129 = vector.load %arg1[%c3_120, %c0_121, %c1_122] : memref<4x6x34xf32, #tpu.memory_space<vmem>>, vector<1x6x6xf32>
    %130 = vector.shape_cast %129 : vector<1x6x6xf32> to vector<6x6xf32>
    %cst_123 = arith.constant dense<0.000000e+00> : vector<6x128xf32>
    %131 = tpu.matmul %130, %124, %cst_123 {dimension_numbers = #tpu.dot_dimension_numbers<[1], [0], [0], [1], [0, 0, 1, 1], [], []>} : vector<6x6xf32>, vector<6x128xf32>, vector<6x128xf32> -> vector<6x128xf32>
    %132 = arith.addf %128, %131 : vector<6x128xf32>
    %c0_124 = arith.constant 0 : index
    %c0_125 = arith.constant 0 : index
    %c0_126 = arith.constant 0 : index
    %133 = vector.load %arg2[%c0_124, %c0_125, %c0_126] : memref<2x21x6xf32, #tpu.memory_space<vmem>>, vector<1x16x6xf32>
    %134 = vector.shape_cast %133 : vector<1x16x6xf32> to vector<16x6xf32>
    %cst_127 = arith.constant dense<0.000000e+00> : vector<16x128xf32>
    %135 = tpu.matmul %134, %124, %cst_127 {dimension_numbers = #tpu.dot_dimension_numbers<[1], [0], [0], [1], [0, 0, 1, 1], [], []>} : vector<16x6xf32>, vector<6x128xf32>, vector<16x128xf32> -> vector<16x128xf32>
    %c1_128 = arith.constant 1 : index
    %c0_129 = arith.constant 0 : index
    %c0_130 = arith.constant 0 : index
    %136 = vector.load %arg2[%c1_128, %c0_129, %c0_130] : memref<2x21x6xf32, #tpu.memory_space<vmem>>, vector<1x16x6xf32>
    %137 = vector.shape_cast %136 : vector<1x16x6xf32> to vector<16x6xf32>
    %cst_131 = arith.constant dense<0.000000e+00> : vector<16x128xf32>
    %138 = tpu.matmul %137, %124, %cst_131 {dimension_numbers = #tpu.dot_dimension_numbers<[1], [0], [0], [1], [0, 0, 1, 1], [], []>} : vector<16x6xf32>, vector<6x128xf32>, vector<16x128xf32> -> vector<16x128xf32>
    %c3_132 = arith.constant 3 : index
    %c0_133 = arith.constant 0 : index
    %c7_134 = arith.constant 7 : index
    %139 = vector.load %arg1[%c3_132, %c0_133, %c7_134] : memref<4x6x34xf32, #tpu.memory_space<vmem>>, vector<1x6x16xf32>
    %140 = vector.shape_cast %139 : vector<1x6x16xf32> to vector<6x16xf32>
    %141 = arith.mulf %135, %138 : vector<16x128xf32>
    %cst_135 = arith.constant dense<0.000000e+00> : vector<6x128xf32>
    %142 = tpu.matmul %140, %141, %cst_135 {dimension_numbers = #tpu.dot_dimension_numbers<[1], [0], [0], [1], [0, 0, 1, 1], [], []>} : vector<6x16xf32>, vector<16x128xf32>, vector<6x128xf32> -> vector<6x128xf32>
    %143 = arith.addf %132, %142 : vector<6x128xf32>
    %c0_136 = arith.constant 0 : index
    %c16_137 = arith.constant 16 : index
    %c0_138 = arith.constant 0 : index
    %144 = vector.load %arg2[%c0_136, %c16_137, %c0_138] : memref<2x21x6xf32, #tpu.memory_space<vmem>>, vector<1x5x6xf32>
    %145 = vector.shape_cast %144 : vector<1x5x6xf32> to vector<5x6xf32>
    %cst_139 = arith.constant dense<0.000000e+00> : vector<5x128xf32>
    %146 = tpu.matmul %145, %124, %cst_139 {dimension_numbers = #tpu.dot_dimension_numbers<[1], [0], [0], [1], [0, 0, 1, 1], [], []>} : vector<5x6xf32>, vector<6x128xf32>, vector<5x128xf32> -> vector<5x128xf32>
    %c1_140 = arith.constant 1 : index
    %c16_141 = arith.constant 16 : index
    %c0_142 = arith.constant 0 : index
    %147 = vector.load %arg2[%c1_140, %c16_141, %c0_142] : memref<2x21x6xf32, #tpu.memory_space<vmem>>, vector<1x5x6xf32>
    %148 = vector.shape_cast %147 : vector<1x5x6xf32> to vector<5x6xf32>
    %cst_143 = arith.constant dense<0.000000e+00> : vector<5x128xf32>
    %149 = tpu.matmul %148, %124, %cst_143 {dimension_numbers = #tpu.dot_dimension_numbers<[1], [0], [0], [1], [0, 0, 1, 1], [], []>} : vector<5x6xf32>, vector<6x128xf32>, vector<5x128xf32> -> vector<5x128xf32>
    %c3_144 = arith.constant 3 : index
    %c0_145 = arith.constant 0 : index
    %c23_146 = arith.constant 23 : index
    %150 = vector.load %arg1[%c3_144, %c0_145, %c23_146] : memref<4x6x34xf32, #tpu.memory_space<vmem>>, vector<1x6x5xf32>
    %151 = vector.shape_cast %150 : vector<1x6x5xf32> to vector<6x5xf32>
    %152 = arith.mulf %146, %149 : vector<5x128xf32>
    %cst_147 = arith.constant dense<0.000000e+00> : vector<6x128xf32>
    %153 = tpu.matmul %151, %152, %cst_147 {dimension_numbers = #tpu.dot_dimension_numbers<[1], [0], [0], [1], [0, 0, 1, 1], [], []>} : vector<6x5xf32>, vector<5x128xf32>, vector<6x128xf32> -> vector<6x128xf32>
    %154 = arith.addf %143, %153 : vector<6x128xf32>
    %c3_148 = arith.constant 3 : index
    %c0_149 = arith.constant 0 : index
    %c28_150 = arith.constant 28 : index
    %155 = vector.load %arg1[%c3_148, %c0_149, %c28_150] : memref<4x6x34xf32, #tpu.memory_space<vmem>>, vector<1x6x6xf32>
    %156 = vector.shape_cast %155 : vector<1x6x6xf32> to vector<6x6xf32>
    %157 = math.sin %124 : vector<6x128xf32>
    %cst_151 = arith.constant dense<0.000000e+00> : vector<6x128xf32>
    %158 = tpu.matmul %156, %157, %cst_151 {dimension_numbers = #tpu.dot_dimension_numbers<[1], [0], [0], [1], [0, 0, 1, 1], [], []>} : vector<6x6xf32>, vector<6x128xf32>, vector<6x128xf32> -> vector<6x128xf32>
    %159 = arith.addf %154, %158 : vector<6x128xf32>
    %160 = arith.addf %124, %159 : vector<6x128xf32>
    %c3_152 = arith.constant 3 : index
    %c0_153 = arith.constant 0 : index
    %c0_154 = arith.constant 0 : index
    %161 = vector.load %arg4[%c3_152, %c0_153, %c0_154] : memref<4x6x128xf32, #tpu.memory_space<vmem>>, vector<1x6x128xf32>
    %162 = vector.shape_cast %161 : vector<1x6x128xf32> to vector<6x128xf32>
    %163 = vector.shape_cast %160 : vector<6x128xf32> to vector<1x6x128xf32>
    tpu.vector_store %arg4[%c3_152, %c0_153, %c0_154], %163 {strides = array<i32>} : memref<4x6x128xf32, #tpu.memory_space<vmem>>, vector<1x6x128xf32>,
    return
  }
  func.func @transform_0(%arg0: i32) -> (i32, i32, i32) {
    %c0_i32 = arith.constant 0 : i32
    %c0_i32_0 = arith.constant 0 : i32
    %c0_i32_1 = arith.constant 0 : i32
    %c0_i32_2 = arith.constant 0 : i32
    return %c0_i32, %c0_i32_0, %c0_i32_1 : i32, i32, i32
  }
  func.func @transform_1(%arg0: i32) -> (i32, i32, i32) {
    %c0_i32 = arith.constant 0 : i32
    %c0_i32_0 = arith.constant 0 : i32
    %c0_i32_1 = arith.constant 0 : i32
    %c0_i32_2 = arith.constant 0 : i32
    return %c0_i32, %c0_i32_0, %c0_i32_1 : i32, i32, i32
  }
  func.func @transform_2(%arg0: i32) -> (i32, i32, i32) {
    %c0_i32 = arith.constant 0 : i32
    %c0_i32_0 = arith.constant 0 : i32
    %c0_i32_1 = arith.constant 0 : i32
    return %c0_i32, %c0_i32_0, %arg0 : i32, i32, i32
  }
  func.func @transform_3(%arg0: i32) -> (i32, i32, i32) {
    %c0_i32 = arith.constant 0 : i32
    %c0_i32_0 = arith.constant 0 : i32
    %c0_i32_1 = arith.constant 0 : i32
    return %c0_i32, %c0_i32_0, %arg0 : i32, i32, i32
  }
}

</mosaic_0001>

<llo_original>
// kernel: tpu_custom_call.1
$region0: #{tpu_custom_call.1}
  #allocation0 [shape = 'u32[]', space=smem, size = 0x4, offset = 0x4, fixed_abs, tag = 'smem constant byte address 0x4 - core index']
  #allocation1 [shape = 'u32[72,128]{1,0:T(1,128)}', space=vmem, size = 0x9000, scoped, tag = 'internal scratch']
  %s0 = inlined_call_operand.vmem [shape: f32[4,6,34], index: 0, kind: input, shape index: {}]
  %s1 = inlined_call_operand.vmem [shape: f32[2,21,6], index: 1, kind: input, shape index: {}]
  %s2 = inlined_call_operand.vmem [shape: f32[4,6,128], index: 2, kind: input, shape index: {}]
  %s3 = inlined_call_operand.vmem [shape: f32[4,6,128], index: 3, kind: output, shape index: {}]
  %s4 = sld [smem:[#allocation0]]
  $region22: #{tpu_custom_call.1} parent=0
    _
  %s6 = ssub.s32 1, %s4
  %s7 = scalar_select 0, %s6, %s4
  // Predicated region
  $region2: #{tpu_custom_call.1} parent=0 // pred_check
    _
  $region3: #{tpu_custom_call.1} parent=0 // pred_check_branch
    %9 = sbr.rel (0) target = $region5
  $region4: #{tpu_custom_call.1} parent=0 // pred_region
    _
  $region5: #{tpu_custom_call.1} parent=0 // pred_fallthru
    _
  // Predicated region
  $region6: #{tpu_custom_call.1} parent=0 // pred_check
    _
  $region7: #{tpu_custom_call.1} parent=0 // pred_check_branch
    %11 = sbr.rel (0) target = $region9
  $region8: #{tpu_custom_call.1} parent=0 // pred_region
    _
  $region9: #{tpu_custom_call.1} parent=0 // pred_fallthru
    _
  // Predicated region
  $region10: #{tpu_custom_call.1} parent=0 // pred_check
    _
  $region11: #{tpu_custom_call.1} parent=0 // pred_check_branch
    %13 = sbr.rel (0) target = $region13
  $region12: #{tpu_custom_call.1} parent=0 // pred_region
    _
  $region13: #{tpu_custom_call.1} parent=0 // pred_fallthru
    _
  %v14 = vld [vmem:[%s2] sm:$0x3f]
  %v15 = vld [vmem:[%s0] sm:$0x3f]
  %17 = vset.pattern.permute.xlu0 0
  %18 = vperm.xlu0 %17, %v15
  %v19 = vpop.permute.xlu0 %18
  %21 = vrot.lane.b32.xlu0 %v15, 127
  %v22 = vpop.permute.xlu0 %21
  %vm23 = vcmask 48128
  %v24 = vsel %vm23, %v22, 0
  %vm26 = vcmask 1045504
  %v28 = vsel %vm26, %v14, 0
  %30 = vmatpush.msra.mxu0 0.0
  %31 = vmatpush.msra.mxu0 0.0
  %32 = vmatpush.msra.mxu0 0.0
  %33 = vmatpush.msra.mxu0 0.0
  %34 = vmatpush.msra.mxu0 0.0
  %35 = vmatpush.msra.mxu0 0.0
  %36 = vmatpush.msra.mxu0 0.0
  %37 = vmatpush.msra.mxu0 0.0
  %38 = vmatpush.msra.mxu0 0.0
  %39 = vmatpush.msra.mxu0 0.0
  %40 = vmatpush.msra.mxu0 0.0
  %41 = vmatpush.msra.mxu0 0.0
  %42 = vmatpush.msra.mxu0 0.0
  %43 = vmatpush.msra.mxu0 0.0
  %44 = vmatpush.msra.mxu0 0.0
  %45 = vmatpush.msra.mxu0 %v28
  %46 = vmatmul.f32.gmra.mxu0 %v24
  %v47 = vpop.f32.mrf.mxu0
  %v48 = vadd.f32 0.0, %v47
  %49 = vdwg.mxu0
  %v50 = vadd.f32 %v19, %v48
  %v51 = vld [vmem:[%s1] sm:$0xff]
  %v52 = vld [vmem:[%s1 + $0x8] sm:$0xff]
  %v54 = vsel %vm23, %v51, 0
  %v57 = vsel %vm23, %v52, 0
  %59 = vmatpush.msra.mxu0 0.0
  %60 = vmatpush.msra.mxu0 0.0
  %61 = vmatpush.msra.mxu0 0.0
  %62 = vmatpush.msra.mxu0 0.0
  %63 = vmatpush.msra.mxu0 0.0
  %64 = vmatpush.msra.mxu0 0.0
  %65 = vmatpush.msra.mxu0 0.0
  %66 = vmatpush.msra.mxu0 0.0
  %67 = vmatpush.msra.mxu0 0.0
  %68 = vmatpush.msra.mxu0 0.0
  %69 = vmatpush.msra.mxu0 0.0
  %70 = vmatpush.msra.mxu0 0.0
  %71 = vmatpush.msra.mxu0 0.0
  %72 = vmatpush.msra.mxu0 0.0
  %73 = vmatpush.msra.mxu0 0.0
  %74 = vmatpush.msra.mxu0 %v28
  %75 = vmatmul.f32.gmra.mxu0 %v54
  %v76 = vpop.f32.mrf.mxu0
  %v77 = vadd.f32 0.0, %v76
  %78 = vmatmul.f32.gmra.mxu0 %v57
  %v79 = vpop.f32.mrf.mxu0
  %v80 = vadd.f32 0.0, %v79
  %81 = vdwg.mxu0
  %s82 = scalar_lea.vmem %s1, 24
  %v83 = vld [vmem:[%s82] sm:$0xff]
  %v84 = vld [vmem:[%s82 + $0x8] sm:$0xff]
  %v86 = vsel %vm23, %v83, 0
  %v89 = vsel %vm23, %v84, 0
  %91 = vmatpush.msra.mxu0 0.0
  %92 = vmatpush.msra.mxu0 0.0
  %93 = vmatpush.msra.mxu0 0.0
  %94 = vmatpush.msra.mxu0 0.0
  %95 = vmatpush.msra.mxu0 0.0
  %96 = vmatpush.msra.mxu0 0.0
  %97 = vmatpush.msra.mxu0 0.0
  %98 = vmatpush.msra.mxu0 0.0
  %99 = vmatpush.msra.mxu0 0.0
  %100 = vmatpush.msra.mxu0 0.0
  %101 = vmatpush.msra.mxu0 0.0
  %102 = vmatpush.msra.mxu0 0.0
  %103 = vmatpush.msra.mxu0 0.0
  %104 = vmatpush.msra.mxu0 0.0
  %105 = vmatpush.msra.mxu0 0.0
  %106 = vmatpush.msra.mxu0 %v28
  %107 = vmatmul.f32.gmra.mxu0 %v86
  %v108 = vpop.f32.mrf.mxu0
  %v109 = vadd.f32 0.0, %v108
  %110 = vmatmul.f32.gmra.mxu0 %v89
  %v111 = vpop.f32.mrf.mxu0
  %v112 = vadd.f32 0.0, %v111
  %113 = vdwg.mxu0
  %v114 = vmul.f32 %v77, %v109
  %v115 = vmul.f32 %v80, %v112
  %116 = vrot.lane.b32.xlu0 %v15, 121
  %v117 = vpop.permute.xlu0 %116
  %vm118 = vcmask 130048
  %v119 = vsel %vm118, %v117, 0
  %121 = vmatpush.msra.mxu0 0.0
  %122 = vmatpush.msra.mxu0 0.0
  %123 = vmatpush.msra.mxu0 0.0
  %124 = vmatpush.msra.mxu0 0.0
  %125 = vmatpush.msra.mxu0 0.0
  %126 = vmatpush.msra.mxu0 0.0
  %127 = vmatpush.msra.mxu0 0.0
  %128 = vmatpush.msra.mxu0 0.0
  %129 = vmatpush.msra.mxu0 0.0
  %130 = vmatpush.msra.mxu0 0.0
  %131 = vmatpush.msra.mxu0 0.0
  %132 = vmatpush.msra.mxu0 0.0
  %133 = vmatpush.msra.mxu0 0.0
  %134 = vmatpush.msra.mxu0 0.0
  %135 = vmatpush.msra.mxu0 %v115
  %136 = vmatpush.msra.mxu0 %v114
  %137 = vmatmul.f32.gmra.mxu0 %v119
  %v138 = vpop.f32.mrf.mxu0
  %v139 = vadd.f32 0.0, %v138
  %140 = vdwg.mxu0
  %v141 = vadd.f32 %v50, %v139
  %v142 = vld [vmem:[%s1 + $0x10] sm:$0x1f]
  %v144 = vsel %vm23, %v142, 0
  %146 = vmatpush.msra.mxu0 0.0
  %147 = vmatpush.msra.mxu0 0.0
  %148 = vmatpush.msra.mxu0 0.0
  %149 = vmatpush.msra.mxu0 0.0
  %150 = vmatpush.msra.mxu0 0.0
  %151 = vmatpush.msra.mxu0 0.0
  %152 = vmatpush.msra.mxu0 0.0
  %153 = vmatpush.msra.mxu0 0.0
  %154 = vmatpush.msra.mxu0 0.0
  %155 = vmatpush.msra.mxu0 0.0
  %156 = vmatpush.msra.mxu0 0.0
  %157 = vmatpush.msra.mxu0 0.0
  %158 = vmatpush.msra.mxu0 0.0
  %159 = vmatpush.msra.mxu0 0.0
  %160 = vmatpush.msra.mxu0 0.0
  %161 = vmatpush.msra.mxu0 %v28
  %162 = vmatmul.f32.gmra.mxu0 %v144
  %v163 = vpop.f32.mrf.mxu0
  %v164 = vadd.f32 0.0, %v163
  %165 = vdwg.mxu0
  %v166 = vld [vmem:[%s82 + $0x10] sm:$0x1f]
  %v168 = vsel %vm23, %v166, 0
  %170 = vmatpush.msra.mxu0 0.0
  %171 = vmatpush.msra.mxu0 0.0
  %172 = vmatpush.msra.mxu0 0.0
  %173 = vmatpush.msra.mxu0 0.0
  %174 = vmatpush.msra.mxu0 0.0
  %175 = vmatpush.msra.mxu0 0.0
  %176 = vmatpush.msra.mxu0 0.0
  %177 = vmatpush.msra.mxu0 0.0
  %178 = vmatpush.msra.mxu0 0.0
  %179 = vmatpush.msra.mxu0 0.0
  %180 = vmatpush.msra.mxu0 0.0
  %181 = vmatpush.msra.mxu0 0.0
  %182 = vmatpush.msra.mxu0 0.0
  %183 = vmatpush.msra.mxu0 0.0
  %184 = vmatpush.msra.mxu0 0.0
  %185 = vmatpush.msra.mxu0 %v28
  %186 = vmatmul.f32.gmra.mxu0 %v168
  %v187 = vpop.f32.mrf.mxu0
  %v188 = vadd.f32 0.0, %v187
  %189 = vdwg.mxu0
  %v190 = vmul.f32 %v164, %v188
  %191 = vrot.lane.b32.xlu0 %v15, 105
  %v192 = vpop.permute.xlu0 %191
  %vm193 = vcmask 39936
  %v194 = vsel %vm193, %v192, 0
  %vm196 = vcmask 1044480
  %v198 = vsel %vm196, %v190, 0
  %200 = vmatpush.msra.mxu0 0.0
  %201 = vmatpush.msra.mxu0 0.0
  %202 = vmatpush.msra.mxu0 0.0
  %203 = vmatpush.msra.mxu0 0.0
  %204 = vmatpush.msra.mxu0 0.0
  %205 = vmatpush.msra.mxu0 0.0
  %206 = vmatpush.msra.mxu0 0.0
  %207 = vmatpush.msra.mxu0 0.0
  %208 = vmatpush.msra.mxu0 0.0
  %209 = vmatpush.msra.mxu0 0.0
  %210 = vmatpush.msra.mxu0 0.0
  %211 = vmatpush.msra.mxu0 0.0
  %212 = vmatpush.msra.mxu0 0.0
  %213 = vmatpush.msra.mxu0 0.0
  %214 = vmatpush.msra.mxu0 0.0
  %215 = vmatpush.msra.mxu0 %v198
  %216 = vmatmul.f32.gmra.mxu0 %v194
  %v217 = vpop.f32.mrf.mxu0
  %v218 = vadd.f32 0.0, %v217
  %219 = vdwg.mxu0
  %v220 = vadd.f32 %v141, %v218
  %v221 = vand.u32 2147483647, %v14
  %vm222 = vcmp.le.f32.partialorder %v221, 0.7853982
  %vm223 = vcmp.lt.s32.totalorder %v14, 0
  %v224 = vand.u32 %v14, 2139095040
  %v225 = vshrl.u32 %v224, 23
  %v226 = vsub.s32 %v225, 127
  %v227 = vand.u32 2147483647, %v14
  %v228 = vand.u32 %v227, 8388607
  %v229 = vor.u32 %v228, 8388608
  %v230 = vsub.s32 0, %v229
  %v231 = vadd.s32 %v226, 1
  %vm232 = vcmp.gt.s32.totalorder %v231, 0
  %v233 = vsel %vm232, %v231, 0
  %v234 = vshrl.u32 %v233, 5
  %v235 = vand.u32 %v233, 31
  %v236 = vsub.s32 32, %v235
  %v237 = vshrl.u32 683565275, %v236
  %v238 = vshll.u32 683565275, %v235
  %v239 = vshrl.u32 2475754826, %v236
  %v240 = vor.u32 %v238, %v239
  %v241 = vshll.u32 2475754826, %v235
  %v242 = vshrl.u32 2131351028, %v236
  %v243 = vor.u32 %v241, %v242
  %v244 = vshll.u32 2131351028, %v235
  %v245 = vshrl.u32 2102212464, %v236
  %v246 = vor.u32 %v244, %v245
  %v247 = vshll.u32 2102212464, %v235
  %v248 = vshrl.u32 920167782, %v236
  %v249 = vor.u32 %v247, %v248
  %v250 = vshll.u32 920167782, %v235
  %v251 = vshrl.u32 1326507024, %v236
  %v252 = vor.u32 %v250, %v251
  %vm253 = vcmp.lt.s32.totalorder %v234, 1
  %vm254 = vcmp.lt.s32.totalorder %v234, 2
  %vm255 = vcmp.lt.s32.totalorder %v234, 3
  %vm256 = vcmp.lt.s32.totalorder %v234, 4
  %v257 = vsel %vm253, %v237, %v240
  %v258 = vsel %vm256, %v246, 2102212464
  %v259 = vsel %vm255, %v243, %v258
  %v260 = vsel %vm254, %v257, %v259
  %v261 = vsel %vm253, %v240, %v243
  %v262 = vsel %vm256, %v249, 920167782
  %v263 = vsel %vm255, %v246, %v262
  %v264 = vsel %vm254, %v261, %v263
  %v265 = vsel %vm253, %v243, %v246
  %v266 = vsel %vm256, %v252, 1326507024
  %v267 = vsel %vm255, %v249, %v266
  %v268 = vsel %vm254, %v265, %v267
  %v269 = vshll.u32 %v229, 8
  %v270 = vand.u32 %v269, 65535
  %v271 = vshrl.u32 %v269, 16
  %v272 = vand.u32 %v268, 65535
  %v273 = vshrl.u32 %v268, 16
  %v274 = vmul.u32 %v270, %v272
  %v275 = vmul.u32 %v270, %v273
  %v276 = vmul.u32 %v271, %v272
  %v277 = vmul.u32 %v271, %v273
  %v278 = vshll.u32 %v275, 16
  %v279 = vshrl.u32 %v275, 16
  %v280 = vshll.u32 %v276, 16
  %v281 = vshrl.u32 %v276, 16
  %vm282 = vc.u32 %v274, %v278
  %v283 = vsel %vm282, 1, 0
  %v284 = vadd.s32 %v274, %v278
  %v285 = vadd.s32 %v277, %v283
  %vm286 = vc.u32 %v284, %v280
  %v287 = vsel %vm286, 1, 0
  %v288 = vadd.s32 %v284, %v280
  %v289 = vadd.s32 %v285, %v287
  %v290 = vadd.s32 %v289, %v279
  %v291 = vadd.s32 %v290, %v281
  %v292 = vand.u32 %v269, 65535
  %v293 = vshrl.u32 %v269, 16
  %v294 = vand.u32 %v264, 65535
  %v295 = vshrl.u32 %v264, 16
  %v296 = vmul.u32 %v292, %v294
  %v297 = vmul.u32 %v292, %v295
  %v298 = vmul.u32 %v293, %v294
  %v299 = vmul.u32 %v293, %v295
  %v300 = vshll.u32 %v297, 16
  %v301 = vshrl.u32 %v297, 16
  %v302 = vshll.u32 %v298, 16
  %v303 = vshrl.u32 %v298, 16
  %vm304 = vc.u32 %v296, %v300
  %v305 = vsel %vm304, 1, 0
  %v306 = vadd.s32 %v296, %v300
  %v307 = vadd.s32 %v299, %v305
  %vm308 = vc.u32 %v306, %v302
  %v309 = vsel %vm308, 1, 0
  %v310 = vadd.s32 %v306, %v302
  %v311 = vadd.s32 %v307, %v309
  %v312 = vadd.s32 %v311, %v301
  %v313 = vadd.s32 %v312, %v303
  %v314 = vmul.u32 %v269, %v260
  %v315 = vadd.s32 %v291, %v310
  %vm316 = vc.u32 %v291, %v310
  %v317 = vadd.s32 %v313, 1
  %v318 = vsel %vm316, %v317, %v313
  %v319 = vadd.s32 %v314, %v318
  %v320 = vadd.s32 %v319, 536870912
  %v321 = vshrl.u32 %v320, 30
  %v322 = vshll.u32 %v321, 30
  %v323 = vsub.s32 %v319, %v322
  %vm324 = vcmp.lt.s32.totalorder %v323, 0
  %v325 = vsub.s32 0, %v323
  %v326 = vsel %vm324, %v325, %v323
  %v327 = vclz %v326
  %v328 = vsub.s32 %v327, 2
  %vm329 = vcmp.gt.s32.totalorder 0, %v328
  %v330 = vsel %vm329, 0, %v328
  %v331 = vsub.s32 32, %v330
  %v332 = vshll.u32 %v323, %v330
  %v333 = vshrl.u32 %v315, %v331
  %v334 = vor.u32 %v332, %v333
  %v335 = vsub.s32 4294967266, %v330
  %v336 = vadd.s32 %v335, 127
  %v337 = vshll.u32 %v336, 23
  %v338 = vor.u32 4788187, %v337
  %v339 = vand.u32 2147483647, %v338
  %v341 = vcvt.s32.f32 %v334
  %v342 = vmul.f32 %v341, %v339
  %v343 = vxor.u32 %v342, 2147483648
  %v344 = vsel %vm223, %v343, %v342
  %v345 = vsub.s32 4, %v321
  %v346 = vsel %vm223, %v345, %v321
  %v347 = vsel %vm222, %v14, %v344
  %v348 = vsel %vm222, 0, %v346
  %v349 = vmul.f32 %v347, %v347
  %v350 = vmul.f32 %v349, -0.001358992
  %v351 = vadd.f32 %v350, 0.041655596
  %v352 = vmul.f32 %v349, %v351
  %v353 = vadd.f32 %v352, -0.4999988
  %v354 = vmul.f32 %v349, %v353
  %v355 = vadd.f32 1.0, %v354
  %v356 = vmul.f32 %v347, %v347
  %v357 = vmul.f32 %v356, -0.00019511016
  %v358 = vadd.f32 %v357, 0.008332121
  %v359 = vmul.f32 %v356, %v358
  %v360 = vadd.f32 %v359, -0.16666654
  %v361 = vmul.f32 %v356, %v360
  %v362 = vadd.f32 %v361, 1.0
  %v363 = vmul.f32 %v362, %v347
  %vm364 = vweird.f32 %v14
  %v365 = vadd.s32 %v348, 3
  %v366 = vand.u32 %v365, 3
  %vm367 = vcmp.lt.s32.totalorder %v366, 2
  %vm368 = vcmp.eq.s32.totalorder %v366, 0
  %v369 = vxor.u32 %v363, 2147483648
  %v370 = vsel %vm368, %v355, %v369
  %vm371 = vcmp.eq.s32.totalorder %v366, 2
  %v372 = vxor.u32 %v355, 2147483648
  %v373 = vsel %vm371, %v372, %v363
  %v374 = vsel %vm367, %v370, %v373
  %v375 = vsel %vm364, nan, %v374
  %376 = vrot.lane.b32.xlu0 %v15, 100
  %v377 = vpop.permute.xlu0 %376
  %v378 = vsel %vm23, %v377, 0
  %v381 = vsel %vm26, %v375, 0
  %383 = vmatpush.msra.mxu0 0.0
  %384 = vmatpush.msra.mxu0 0.0
  %385 = vmatpush.msra.mxu0 0.0
  %386 = vmatpush.msra.mxu0 0.0
  %387 = vmatpush.msra.mxu0 0.0
  %388 = vmatpush.msra.mxu0 0.0
  %389 = vmatpush.msra.mxu0 0.0
  %390 = vmatpush.msra.mxu0 0.0
  %391 = vmatpush.msra.mxu0 0.0
  %392 = vmatpush.msra.mxu0 0.0
  %393 = vmatpush.msra.mxu0 0.0
  %394 = vmatpush.msra.mxu0 0.0
  %395 = vmatpush.msra.mxu0 0.0
  %396 = vmatpush.msra.mxu0 0.0
  %397 = vmatpush.msra.mxu0 0.0
  %398 = vmatpush.msra.mxu0 %v381
  %399 = vmatmul.f32.gmra.mxu0 %v378
  %v400 = vpop.f32.mrf.mxu0
  %v401 = vadd.f32 0.0, %v400
  %402 = vdwg.mxu0
  %v403 = vadd.f32 %v220, %v401
  %v404 = vadd.f32 %v14, %v403
  %405 = vst [vmem:[%s3] sm:$0x3f] %v404
  %s406 = scalar_lea.vmem %s2, 8
  %v407 = vld [vmem:[%s406] sm:$0x3f]
  %s408 = scalar_lea.vmem %s0, 8
  %v409 = vld [vmem:[%s408] sm:$0x3f]
  %411 = vset.pattern.permute.xlu0 0
  %412 = vperm.xlu0 %411, %v409
  %v413 = vpop.permute.xlu0 %412
  %415 = vrot.lane.b32.xlu0 %v409, 127
  %v416 = vpop.permute.xlu0 %415
  %v417 = vsel %vm23, %v416, 0
  %v420 = vsel %vm26, %v407, 0
  %422 = vmatpush.msra.mxu0 0.0
  %423 = vmatpush.msra.mxu0 0.0
  %424 = vmatpush.msra.mxu0 0.0
  %425 = vmatpush.msra.mxu0 0.0
  %426 = vmatpush.msra.mxu0 0.0
  %427 = vmatpush.msra.mxu0 0.0
  %428 = vmatpush.msra.mxu0 0.0
  %429 = vmatpush.msra.mxu0 0.0
  %430 = vmatpush.msra.mxu0 0.0
  %431 = vmatpush.msra.mxu0 0.0
  %432 = vmatpush.msra.mxu0 0.0
  %433 = vmatpush.msra.mxu0 0.0
  %434 = vmatpush.msra.mxu0 0.0
  %435 = vmatpush.msra.mxu0 0.0
  %436 = vmatpush.msra.mxu0 0.0
  %437 = vmatpush.msra.mxu0 %v420
  %438 = vmatmul.f32.gmra.mxu0 %v417
  %v439 = vpop.f32.mrf.mxu0
  %v440 = vadd.f32 0.0, %v439
  %441 = vdwg.mxu0
  %v442 = vadd.f32 %v413, %v440
  %v443 = vld [vmem:[%s1] sm:$0xff]
  %v444 = vld [vmem:[%s1 + $0x8] sm:$0xff]
  %v446 = vsel %vm23, %v443, 0
  %v449 = vsel %vm23, %v444, 0
  %451 = vmatpush.msra.mxu0 0.0
  %452 = vmatpush.msra.mxu0 0.0
  %453 = vmatpush.msra.mxu0 0.0
  %454 = vmatpush.msra.mxu0 0.0
  %455 = vmatpush.msra.mxu0 0.0
  %456 = vmatpush.msra.mxu0 0.0
  %457 = vmatpush.msra.mxu0 0.0
  %458 = vmatpush.msra.mxu0 0.0
  %459 = vmatpush.msra.mxu0 0.0
  %460 = vmatpush.msra.mxu0 0.0
  %461 = vmatpush.msra.mxu0 0.0
  %462 = vmatpush.msra.mxu0 0.0
  %463 = vmatpush.msra.mxu0 0.0
  %464 = vmatpush.msra.mxu0 0.0
  %465 = vmatpush.msra.mxu0 0.0
  %466 = vmatpush.msra.mxu0 %v420
  %467 = vmatmul.f32.gmra.mxu0 %v446
  %v468 = vpop.f32.mrf.mxu0
  %v469 = vadd.f32 0.0, %v468
  %470 = vmatmul.f32.gmra.mxu0 %v449
  %v471 = vpop.f32.mrf.mxu0
  %v472 = vadd.f32 0.0, %v471
  %473 = vdwg.mxu0
  %v474 = vld [vmem:[%s82] sm:$0xff]
  %v475 = vld [vmem:[%s82 + $0x8] sm:$0xff]
  %v477 = vsel %vm23, %v474, 0
  %v480 = vsel %vm23, %v475, 0
  %482 = vmatpush.msra.mxu0 0.0
  %483 = vmatpush.msra.mxu0 0.0
  %484 = vmatpush.msra.mxu0 0.0
  %485 = vmatpush.msra.mxu0 0.0
  %486 = vmatpush.msra.mxu0 0.0
  %487 = vmatpush.msra.mxu0 0.0
  %488 = vmatpush.msra.mxu0 0.0
  %489 = vmatpush.msra.mxu0 0.0
  %490 = vmatpush.msra.mxu0 0.0
  %491 = vmatpush.msra.mxu0 0.0
  %492 = vmatpush.msra.mxu0 0.0
  %493 = vmatpush.msra.mxu0 0.0
  %494 = vmatpush.msra.mxu0 0.0
  %495 = vmatpush.msra.mxu0 0.0
  %496 = vmatpush.msra.mxu0 0.0
  %497 = vmatpush.msra.mxu0 %v420
  %498 = vmatmul.f32.gmra.mxu0 %v477
  %v499 = vpop.f32.mrf.mxu0
  %v500 = vadd.f32 0.0, %v499
  %501 = vmatmul.f32.gmra.mxu0 %v480
  %v502 = vpop.f32.mrf.mxu0
  %v503 = vadd.f32 0.0, %v502
  %504 = vdwg.mxu0
  %v505 = vmul.f32 %v469, %v500
  %v506 = vmul.f32 %v472, %v503
  %507 = vrot.lane.b32.xlu0 %v409, 121
  %v508 = vpop.permute.xlu0 %507
  %v509 = vsel %vm118, %v508, 0
  %511 = vmatpush.msra.mxu0 0.0
  %512 = vmatpush.msra.mxu0 0.0
  %513 = vmatpush.msra.mxu0 0.0
  %514 = vmatpush.msra.mxu0 0.0
  %515 = vmatpush.msra.mxu0 0.0
  %516 = vmatpush.msra.mxu0 0.0
  %517 = vmatpush.msra.mxu0 0.0
  %518 = vmatpush.msra.mxu0 0.0
  %519 = vmatpush.msra.mxu0 0.0
  %520 = vmatpush.msra.mxu0 0.0
  %521 = vmatpush.msra.mxu0 0.0
  %522 = vmatpush.msra.mxu0 0.0
  %523 = vmatpush.msra.mxu0 0.0
  %524 = vmatpush.msra.mxu0 0.0
  %525 = vmatpush.msra.mxu0 %v506
  %526 = vmatpush.msra.mxu0 %v505
  %527 = vmatmul.f32.gmra.mxu0 %v509
  %v528 = vpop.f32.mrf.mxu0
  %v529 = vadd.f32 0.0, %v528
  %530 = vdwg.mxu0
  %v531 = vadd.f32 %v442, %v529
  %v532 = vld [vmem:[%s1 + $0x10] sm:$0x1f]
  %v534 = vsel %vm23, %v532, 0
  %536 = vmatpush.msra.mxu0 0.0
  %537 = vmatpush.msra.mxu0 0.0
  %538 = vmatpush.msra.mxu0 0.0
  %539 = vmatpush.msra.mxu0 0.0
  %540 = vmatpush.msra.mxu0 0.0
  %541 = vmatpush.msra.mxu0 0.0
  %542 = vmatpush.msra.mxu0 0.0
  %543 = vmatpush.msra.mxu0 0.0
  %544 = vmatpush.msra.mxu0 0.0
  %545 = vmatpush.msra.mxu0 0.0
  %546 = vmatpush.msra.mxu0 0.0
  %547 = vmatpush.msra.mxu0 0.0
  %548 = vmatpush.msra.mxu0 0.0
  %549 = vmatpush.msra.mxu0 0.0
  %550 = vmatpush.msra.mxu0 0.0
  %551 = vmatpush.msra.mxu0 %v420
  %552 = vmatmul.f32.gmra.mxu0 %v534
  %v553 = vpop.f32.mrf.mxu0
  %v554 = vadd.f32 0.0, %v553
  %555 = vdwg.mxu0
  %v556 = vld [vmem:[%s82 + $0x10] sm:$0x1f]
  %v558 = vsel %vm23, %v556, 0
  %560 = vmatpush.msra.mxu0 0.0
  %561 = vmatpush.msra.mxu0 0.0
  %562 = vmatpush.msra.mxu0 0.0
  %563 = vmatpush.msra.mxu0 0.0
  %564 = vmatpush.msra.mxu0 0.0
  %565 = vmatpush.msra.mxu0 0.0
  %566 = vmatpush.msra.mxu0 0.0
  %567 = vmatpush.msra.mxu0 0.0
  %568 = vmatpush.msra.mxu0 0.0
  %569 = vmatpush.msra.mxu0 0.0
  %570 = vmatpush.msra.mxu0 0.0
  %571 = vmatpush.msra.mxu0 0.0
  %572 = vmatpush.msra.mxu0 0.0
  %573 = vmatpush.msra.mxu0 0.0
  %574 = vmatpush.msra.mxu0 0.0
  %575 = vmatpush.msra.mxu0 %v420
  %576 = vmatmul.f32.gmra.mxu0 %v558
  %v577 = vpop.f32.mrf.mxu0
  %v578 = vadd.f32 0.0, %v577
  %579 = vdwg.mxu0
  %v580 = vmul.f32 %v554, %v578
  %581 = vrot.lane.b32.xlu0 %v409, 105
  %v582 = vpop.permute.xlu0 %581
  %v583 = vsel %vm193, %v582, 0
  %v586 = vsel %vm196, %v580, 0
  %588 = vmatpush.msra.mxu0 0.0
  %589 = vmatpush.msra.mxu0 0.0
  %590 = vmatpush.msra.mxu0 0.0
  %591 = vmatpush.msra.mxu0 0.0
  %592 = vmatpush.msra.mxu0 0.0
  %593 = vmatpush.msra.mxu0 0.0
  %594 = vmatpush.msra.mxu0 0.0
  %595 = vmatpush.msra.mxu0 0.0
  %596 = vmatpush.msra.mxu0 0.0
  %597 = vmatpush.msra.mxu0 0.0
  %598 = vmatpush.msra.mxu0 0.0
  %599 = vmatpush.msra.mxu0 0.0
  %600 = vmatpush.msra.mxu0 0.0
  %601 = vmatpush.msra.mxu0 0.0
  %602 = vmatpush.msra.mxu0 0.0
  %603 = vmatpush.msra.mxu0 %v586
  %604 = vmatmul.f32.gmra.mxu0 %v583
  %v605 = vpop.f32.mrf.mxu0
  %v606 = vadd.f32 0.0, %v605
  %607 = vdwg.mxu0
  %v608 = vadd.f32 %v531, %v606
  %v609 = vand.u32 2147483647, %v407
  %vm610 = vcmp.le.f32.partialorder %v609, 0.7853982
  %vm611 = vcmp.lt.s32.totalorder %v407, 0
  %v612 = vand.u32 %v407, 2139095040
  %v613 = vshrl.u32 %v612, 23
  %v614 = vsub.s32 %v613, 127
  %v615 = vand.u32 2147483647, %v407
  %v616 = vand.u32 %v615, 8388607
  %v617 = vor.u32 %v616, 8388608
  %v618 = vsub.s32 0, %v617
  %v619 = vadd.s32 %v614, 1
  %vm620 = vcmp.gt.s32.totalorder %v619, 0
  %v621 = vsel %vm620, %v619, 0
  %v622 = vshrl.u32 %v621, 5
  %v623 = vand.u32 %v621, 31
  %v624 = vsub.s32 32, %v623
  %v625 = vshrl.u32 683565275, %v624
  %v626 = vshll.u32 683565275, %v623
  %v627 = vshrl.u32 2475754826, %v624
  %v628 = vor.u32 %v626, %v627
  %v629 = vshll.u32 2475754826, %v623
  %v630 = vshrl.u32 2131351028, %v624
  %v631 = vor.u32 %v629, %v630
  %v632 = vshll.u32 2131351028, %v623
  %v633 = vshrl.u32 2102212464, %v624
  %v634 = vor.u32 %v632, %v633
  %v635 = vshll.u32 2102212464, %v623
  %v636 = vshrl.u32 920167782, %v624
  %v637 = vor.u32 %v635, %v636
  %v638 = vshll.u32 920167782, %v623
  %v639 = vshrl.u32 1326507024, %v624
  %v640 = vor.u32 %v638, %v639
  %vm641 = vcmp.lt.s32.totalorder %v622, 1
  %vm642 = vcmp.lt.s32.totalorder %v622, 2
  %vm643 = vcmp.lt.s32.totalorder %v622, 3
  %vm644 = vcmp.lt.s32.totalorder %v622, 4
  %v645 = vsel %vm641, %v625, %v628
  %v646 = vsel %vm644, %v634, 2102212464
  %v647 = vsel %vm643, %v631, %v646
  %v648 = vsel %vm642, %v645, %v647
  %v649 = vsel %vm641, %v628, %v631
  %v650 = vsel %vm644, %v637, 920167782
  %v651 = vsel %vm643, %v634, %v650
  %v652 = vsel %vm642, %v649, %v651
  %v653 = vsel %vm641, %v631, %v634
  %v654 = vsel %vm644, %v640, 1326507024
  %v655 = vsel %vm643, %v637, %v654
  %v656 = vsel %vm642, %v653, %v655
  %v657 = vshll.u32 %v617, 8
  %v658 = vand.u32 %v657, 65535
  %v659 = vshrl.u32 %v657, 16
  %v660 = vand.u32 %v656, 65535
  %v661 = vshrl.u32 %v656, 16
  %v662 = vmul.u32 %v658, %v660
  %v663 = vmul.u32 %v658, %v661
  %v664 = vmul.u32 %v659, %v660
  %v665 = vmul.u32 %v659, %v661
  %v666 = vshll.u32 %v663, 16
  %v667 = vshrl.u32 %v663, 16
  %v668 = vshll.u32 %v664, 16
  %v669 = vshrl.u32 %v664, 16
  %vm670 = vc.u32 %v662, %v666
  %v671 = vsel %vm670, 1, 0
  %v672 = vadd.s32 %v662, %v666
  %v673 = vadd.s32 %v665, %v671
  %vm674 = vc.u32 %v672, %v668
  %v675 = vsel %vm674, 1, 0
  %v676 = vadd.s32 %v672, %v668
  %v677 = vadd.s32 %v673, %v675
  %v678 = vadd.s32 %v677, %v667
  %v679 = vadd.s32 %v678, %v669
  %v680 = vand.u32 %v657, 65535
  %v681 = vshrl.u32 %v657, 16
  %v682 = vand.u32 %v652, 65535
  %v683 = vshrl.u32 %v652, 16
  %v684 = vmul.u32 %v680, %v682
  %v685 = vmul.u32 %v680, %v683
  %v686 = vmul.u32 %v681, %v682
  %v687 = vmul.u32 %v681, %v683
  %v688 = vshll.u32 %v685, 16
  %v689 = vshrl.u32 %v685, 16
  %v690 = vshll.u32 %v686, 16
  %v691 = vshrl.u32 %v686, 16
  %vm692 = vc.u32 %v684, %v688
  %v693 = vsel %vm692, 1, 0
  %v694 = vadd.s32 %v684, %v688
  %v695 = vadd.s32 %v687, %v693
  %vm696 = vc.u32 %v694, %v690
  %v697 = vsel %vm696, 1, 0
  %v698 = vadd.s32 %v694, %v690
  %v699 = vadd.s32 %v695, %v697
  %v700 = vadd.s32 %v699, %v689
  %v701 = vadd.s32 %v700, %v691
  %v702 = vmul.u32 %v657, %v648
  %v703 = vadd.s32 %v679, %v698
  %vm704 = vc.u32 %v679, %v698
  %v705 = vadd.s32 %v701, 1
  %v706 = vsel %vm704, %v705, %v701
  %v707 = vadd.s32 %v702, %v706
  %v708 = vadd.s32 %v707, 536870912
  %v709 = vshrl.u32 %v708, 30
  %v710 = vshll.u32 %v709, 30
  %v711 = vsub.s32 %v707, %v710
  %vm712 = vcmp.lt.s32.totalorder %v711, 0
  %v713 = vsub.s32 0, %v711
  %v714 = vsel %vm712, %v713, %v711
  %v715 = vclz %v714
  %v716 = vsub.s32 %v715, 2
  %vm717 = vcmp.gt.s32.totalorder 0, %v716
  %v718 = vsel %vm717, 0, %v716
  %v719 = vsub.s32 32, %v718
  %v720 = vshll.u32 %v711, %v718
  %v721 = vshrl.u32 %v703, %v719
  %v722 = vor.u32 %v720, %v721
  %v723 = vsub.s32 4294967266, %v718
  %v724 = vadd.s32 %v723, 127
  %v725 = vshll.u32 %v724, 23
  %v726 = vor.u32 4788187, %v725
  %v727 = vand.u32 2147483647, %v726
  %v729 = vcvt.s32.f32 %v722
  %v730 = vmul.f32 %v729, %v727
  %v731 = vxor.u32 %v730, 2147483648
  %v732 = vsel %vm611, %v731, %v730
  %v733 = vsub.s32 4, %v709
  %v734 = vsel %vm611, %v733, %v709
  %v735 = vsel %vm610, %v407, %v732
  %v736 = vsel %vm610, 0, %v734
  %v737 = vmul.f32 %v735, %v735
  %v738 = vmul.f32 %v737, -0.001358992
  %v739 = vadd.f32 %v738, 0.041655596
  %v740 = vmul.f32 %v737, %v739
  %v741 = vadd.f32 %v740, -0.4999988
  %v742 = vmul.f32 %v737, %v741
  %v743 = vadd.f32 1.0, %v742
  %v744 = vmul.f32 %v735, %v735
  %v745 = vmul.f32 %v744, -0.00019511016
  %v746 = vadd.f32 %v745, 0.008332121
  %v747 = vmul.f32 %v744, %v746
  %v748 = vadd.f32 %v747, -0.16666654
  %v749 = vmul.f32 %v744, %v748
  %v750 = vadd.f32 %v749, 1.0
  %v751 = vmul.f32 %v750, %v735
  %vm752 = vweird.f32 %v407
  %v753 = vadd.s32 %v736, 3
  %v754 = vand.u32 %v753, 3
  %vm755 = vcmp.lt.s32.totalorder %v754, 2
  %vm756 = vcmp.eq.s32.totalorder %v754, 0
  %v757 = vxor.u32 %v751, 2147483648
  %v758 = vsel %vm756, %v743, %v757
  %vm759 = vcmp.eq.s32.totalorder %v754, 2
  %v760 = vxor.u32 %v743, 2147483648
  %v761 = vsel %vm759, %v760, %v751
  %v762 = vsel %vm755, %v758, %v761
  %v763 = vsel %vm752, nan, %v762
  %764 = vrot.lane.b32.xlu0 %v409, 100
  %v765 = vpop.permute.xlu0 %764
  %v766 = vsel %vm23, %v765, 0
  %v769 = vsel %vm26, %v763, 0
  %771 = vmatpush.msra.mxu0 0.0
  %772 = vmatpush.msra.mxu0 0.0
  %773 = vmatpush.msra.mxu0 0.0
  %774 = vmatpush.msra.mxu0 0.0
  %775 = vmatpush.msra.mxu0 0.0
  %776 = vmatpush.msra.mxu0 0.0
  %777 = vmatpush.msra.mxu0 0.0
  %778 = vmatpush.msra.mxu0 0.0
  %779 = vmatpush.msra.mxu0 0.0
  %780 = vmatpush.msra.mxu0 0.0
  %781 = vmatpush.msra.mxu0 0.0
  %782 = vmatpush.msra.mxu0 0.0
  %783 = vmatpush.msra.mxu0 0.0
  %784 = vmatpush.msra.mxu0 0.0
  %785 = vmatpush.msra.mxu0 0.0
  %786 = vmatpush.msra.mxu0 %v769
  %787 = vmatmul.f32.gmra.mxu0 %v766
  %v788 = vpop.f32.mrf.mxu0
  %v789 = vadd.f32 0.0, %v788
  %790 = vdwg.mxu0
  %v791 = vadd.f32 %v608, %v789
  %v792 = vadd.f32 %v407, %v791
  %s793 = scalar_lea.vmem %s3, 8
  %794 = vst [vmem:[%s793] sm:$0x3f] %v792
  %s795 = scalar_lea.vmem %s2, 16
  %v796 = vld [vmem:[%s795] sm:$0x3f]
  %s797 = scalar_lea.vmem %s0, 16
  %v798 = vld [vmem:[%s797] sm:$0x3f]
  %800 = vset.pattern.permute.xlu0 0
  %801 = vperm.xlu0 %800, %v798
  %v802 = vpop.permute.xlu0 %801
  %804 = vrot.lane.b32.xlu0 %v798, 127
  %v805 = vpop.permute.xlu0 %804
  %v806 = vsel %vm23, %v805, 0
  %v809 = vsel %vm26, %v796, 0
  %811 = vmatpush.msra.mxu0 0.0
  %812 = vmatpush.msra.mxu0 0.0
  %813 = vmatpush.msra.mxu0 0.0
  %814 = vmatpush.msra.mxu0 0.0
  %815 = vmatpush.msra.mxu0 0.0
  %816 = vmatpush.msra.mxu0 0.0
  %817 = vmatpush.msra.mxu0 0.0
  %818 = vmatpush.msra.mxu0 0.0
  %819 = vmatpush.msra.mxu0 0.0
  %820 = vmatpush.msra.mxu0 0.0
  %821 = vmatpush.msra.mxu0 0.0
  %822 = vmatpush.msra.mxu0 0.0
  %823 = vmatpush.msra.mxu0 0.0
  %824 = vmatpush.msra.mxu0 0.0
  %825 = vmatpush.msra.mxu0 0.0
  %826 = vmatpush.msra.mxu0 %v809
  %827 = vmatmul.f32.gmra.mxu0 %v806
  %v828 = vpop.f32.mrf.mxu0
  %v829 = vadd.f32 0.0, %v828
  %830 = vdwg.mxu0
  %v831 = vadd.f32 %v802, %v829
  %v832 = vld [vmem:[%s1] sm:$0xff]
  %v833 = vld [vmem:[%s1 + $0x8] sm:$0xff]
  %v835 = vsel %vm23, %v832, 0
  %v838 = vsel %vm23, %v833, 0
  %840 = vmatpush.msra.mxu0 0.0
  %841 = vmatpush.msra.mxu0 0.0
  %842 = vmatpush.msra.mxu0 0.0
  %843 = vmatpush.msra.mxu0 0.0
  %844 = vmatpush.msra.mxu0 0.0
  %845 = vmatpush.msra.mxu0 0.0
  %846 = vmatpush.msra.mxu0 0.0
  %847 = vmatpush.msra.mxu0 0.0
  %848 = vmatpush.msra.mxu0 0.0
  %849 = vmatpush.msra.mxu0 0.0
  %850 = vmatpush.msra.mxu0 0.0
  %851 = vmatpush.msra.mxu0 0.0
  %852 = vmatpush.msra.mxu0 0.0
  %853 = vmatpush.msra.mxu0 0.0
  %854 = vmatpush.msra.mxu0 0.0
  %855 = vmatpush.msra.mxu0 %v809
  %856 = vmatmul.f32.gmra.mxu0 %v835
  %v857 = vpop.f32.mrf.mxu0
  %v858 = vadd.f32 0.0, %v857
  %859 = vmatmul.f32.gmra.mxu0 %v838
  %v860 = vpop.f32.mrf.mxu0
  %v861 = vadd.f32 0.0, %v860
  %862 = vdwg.mxu0
  %v863 = vld [vmem:[%s82] sm:$0xff]
  %v864 = vld [vmem:[%s82 + $0x8] sm:$0xff]
  %v866 = vsel %vm23, %v863, 0
  %v869 = vsel %vm23, %v864, 0
  %871 = vmatpush.msra.mxu0 0.0
  %872 = vmatpush.msra.mxu0 0.0
  %873 = vmatpush.msra.mxu0 0.0
  %874 = vmatpush.msra.mxu0 0.0
  %875 = vmatpush.msra.mxu0 0.0
  %876 = vmatpush.msra.mxu0 0.0
  %877 = vmatpush.msra.mxu0 0.0
  %878 = vmatpush.msra.mxu0 0.0
  %879 = vmatpush.msra.mxu0 0.0
  %880 = vmatpush.msra.mxu0 0.0
  %881 = vmatpush.msra.mxu0 0.0
  %882 = vmatpush.msra.mxu0 0.0
  %883 = vmatpush.msra.mxu0 0.0
  %884 = vmatpush.msra.mxu0 0.0
  %885 = vmatpush.msra.mxu0 0.0
  %886 = vmatpush.msra.mxu0 %v809
  %887 = vmatmul.f32.gmra.mxu0 %v866
  %v888 = vpop.f32.mrf.mxu0
  %v889 = vadd.f32 0.0, %v888
  %890 = vmatmul.f32.gmra.mxu0 %v869
  %v891 = vpop.f32.mrf.mxu0
  %v892 = vadd.f32 0.0, %v891
  %893 = vdwg.mxu0
  %v894 = vmul.f32 %v858, %v889
  %v895 = vmul.f32 %v861, %v892
  %896 = vrot.lane.b32.xlu0 %v798, 121
  %v897 = vpop.permute.xlu0 %896
  %v898 = vsel %vm118, %v897, 0
  %900 = vmatpush.msra.mxu0 0.0
  %901 = vmatpush.msra.mxu0 0.0
  %902 = vmatpush.msra.mxu0 0.0
  %903 = vmatpush.msra.mxu0 0.0
  %904 = vmatpush.msra.mxu0 0.0
  %905 = vmatpush.msra.mxu0 0.0
  %906 = vmatpush.msra.mxu0 0.0
  %907 = vmatpush.msra.mxu0 0.0
  %908 = vmatpush.msra.mxu0 0.0
  %909 = vmatpush.msra.mxu0 0.0
  %910 = vmatpush.msra.mxu0 0.0
  %911 = vmatpush.msra.mxu0 0.0
  %912 = vmatpush.msra.mxu0 0.0
  %913 = vmatpush.msra.mxu0 0.0
  %914 = vmatpush.msra.mxu0 %v895
  %915 = vmatpush.msra.mxu0 %v894
  %916 = vmatmul.f32.gmra.mxu0 %v898
  %v917 = vpop.f32.mrf.mxu0
  %v918 = vadd.f32 0.0, %v917
  %919 = vdwg.mxu0
  %v920 = vadd.f32 %v831, %v918
  %v921 = vld [vmem:[%s1 + $0x10] sm:$0x1f]
  %v923 = vsel %vm23, %v921, 0
  %925 = vmatpush.msra.mxu0 0.0
  %926 = vmatpush.msra.mxu0 0.0
  %927 = vmatpush.msra.mxu0 0.0
  %928 = vmatpush.msra.mxu0 0.0
  %929 = vmatpush.msra.mxu0 0.0
  %930 = vmatpush.msra.mxu0 0.0
  %931 = vmatpush.msra.mxu0 0.0
  %932 = vmatpush.msra.mxu0 0.0
  %933 = vmatpush.msra.mxu0 0.0
  %934 = vmatpush.msra.mxu0 0.0
  %935 = vmatpush.msra.mxu0 0.0
  %936 = vmatpush.msra.mxu0 0.0
  %937 = vmatpush.msra.mxu0 0.0
  %938 = vmatpush.msra.mxu0 0.0
  %939 = vmatpush.msra.mxu0 0.0
  %940 = vmatpush.msra.mxu0 %v809
  %941 = vmatmul.f32.gmra.mxu0 %v923
  %v942 = vpop.f32.mrf.mxu0
  %v943 = vadd.f32 0.0, %v942
  %944 = vdwg.mxu0
  %v945 = vld [vmem:[%s82 + $0x10] sm:$0x1f]
  %v947 = vsel %vm23, %v945, 0
  %949 = vmatpush.msra.mxu0 0.0
  %950 = vmatpush.msra.mxu0 0.0
  %951 = vmatpush.msra.mxu0 0.0
  %952 = vmatpush.msra.mxu0 0.0
  %953 = vmatpush.msra.mxu0 0.0
  %954 = vmatpush.msra.mxu0 0.0
  %955 = vmatpush.msra.mxu0 0.0
  %956 = vmatpush.msra.mxu0 0.0
  %957 = vmatpush.msra.mxu0 0.0
  %958 = vmatpush.msra.mxu0 0.0
  %959 = vmatpush.msra.mxu0 0.0
  %960 = vmatpush.msra.mxu0 0.0
  %961 = vmatpush.msra.mxu0 0.0
  %962 = vmatpush.msra.mxu0 0.0
  %963 = vmatpush.msra.mxu0 0.0
  %964 = vmatpush.msra.mxu0 %v809
  %965 = vmatmul.f32.gmra.mxu0 %v947
  %v966 = vpop.f32.mrf.mxu0
  %v967 = vadd.f32 0.0, %v966
  %968 = vdwg.mxu0
  %v969 = vmul.f32 %v943, %v967
  %970 = vrot.lane.b32.xlu0 %v798, 105
  %v971 = vpop.permute.xlu0 %970
  %v972 = vsel %vm193, %v971, 0
  %v975 = vsel %vm196, %v969, 0
  %977 = vmatpush.msra.mxu0 0.0
  %978 = vmatpush.msra.mxu0 0.0
  %979 = vmatpush.msra.mxu0 0.0
  %980 = vmatpush.msra.mxu0 0.0
  %981 = vmatpush.msra.mxu0 0.0
  %982 = vmatpush.msra.mxu0 0.0
  %983 = vmatpush.msra.mxu0 0.0
  %984 = vmatpush.msra.mxu0 0.0
  %985 = vmatpush.msra.mxu0 0.0
  %986 = vmatpush.msra.mxu0 0.0
  %987 = vmatpush.msra.mxu0 0.0
  %988 = vmatpush.msra.mxu0 0.0
  %989 = vmatpush.msra.mxu0 0.0
  %990 = vmatpush.msra.mxu0 0.0
  %991 = vmatpush.msra.mxu0 0.0
  %992 = vmatpush.msra.mxu0 %v975
  %993 = vmatmul.f32.gmra.mxu0 %v972
  %v994 = vpop.f32.mrf.mxu0
  %v995 = vadd.f32 0.0, %v994
  %996 = vdwg.mxu0
  %v997 = vadd.f32 %v920, %v995
  %v998 = vand.u32 2147483647, %v796
  %vm999 = vcmp.le.f32.partialorder %v998, 0.7853982
  %vm1000 = vcmp.lt.s32.totalorder %v796, 0
  %v1001 = vand.u32 %v796, 2139095040
  %v1002 = vshrl.u32 %v1001, 23
  %v1003 = vsub.s32 %v1002, 127
  %v1004 = vand.u32 2147483647, %v796
  %v1005 = vand.u32 %v1004, 8388607
  %v1006 = vor.u32 %v1005, 8388608
  %v1007 = vsub.s32 0, %v1006
  %v1008 = vadd.s32 %v1003, 1
  %vm1009 = vcmp.gt.s32.totalorder %v1008, 0
  %v1010 = vsel %vm1009, %v1008, 0
  %v1011 = vshrl.u32 %v1010, 5
  %v1012 = vand.u32 %v1010, 31
  %v1013 = vsub.s32 32, %v1012
  %v1014 = vshrl.u32 683565275, %v1013
  %v1015 = vshll.u32 683565275, %v1012
  %v1016 = vshrl.u32 2475754826, %v1013
  %v1017 = vor.u32 %v1015, %v1016
  %v1018 = vshll.u32 2475754826, %v1012
  %v1019 = vshrl.u32 2131351028, %v1013
  %v1020 = vor.u32 %v1018, %v1019
  %v1021 = vshll.u32 2131351028, %v1012
  %v1022 = vshrl.u32 2102212464, %v1013
  %v1023 = vor.u32 %v1021, %v1022
  %v1024 = vshll.u32 2102212464, %v1012
  %v1025 = vshrl.u32 920167782, %v1013
  %v1026 = vor.u32 %v1024, %v1025
  %v1027 = vshll.u32 920167782, %v1012
  %v1028 = vshrl.u32 1326507024, %v1013
  %v1029 = vor.u32 %v1027, %v1028
  %vm1030 = vcmp.lt.s32.totalorder %v1011, 1
  %vm1031 = vcmp.lt.s32.totalorder %v1011, 2
  %vm1032 = vcmp.lt.s32.totalorder %v1011, 3
  %vm1033 = vcmp.lt.s32.totalorder %v1011, 4
  %v1034 = vsel %vm1030, %v1014, %v1017
  %v1035 = vsel %vm1033, %v1023, 2102212464
  %v1036 = vsel %vm1032, %v1020, %v1035
  %v1037 = vsel %vm1031, %v1034, %v1036
  %v1038 = vsel %vm1030, %v1017, %v1020
  %v1039 = vsel %vm1033, %v1026, 920167782
  %v1040 = vsel %vm1032, %v1023, %v1039
  %v1041 = vsel %vm1031, %v1038, %v1040
  %v1042 = vsel %vm1030, %v1020, %v1023
  %v1043 = vsel %vm1033, %v1029, 1326507024
  %v1044 = vsel %vm1032, %v1026, %v1043
  %v1045 = vsel %vm1031, %v1042, %v1044
  %v1046 = vshll.u32 %v1006, 8
  %v1047 = vand.u32 %v1046, 65535
  %v1048 = vshrl.u32 %v1046, 16
  %v1049 = vand.u32 %v1045, 65535
  %v1050 = vshrl.u32 %v1045, 16
  %v1051 = vmul.u32 %v1047, %v1049
  %v1052 = vmul.u32 %v1047, %v1050
  %v1053 = vmul.u32 %v1048, %v1049
  %v1054 = vmul.u32 %v1048, %v1050
  %v1055 = vshll.u32 %v1052, 16
  %v1056 = vshrl.u32 %v1052, 16
  %v1057 = vshll.u32 %v1053, 16
  %v1058 = vshrl.u32 %v1053, 16
  %vm1059 = vc.u32 %v1051, %v1055
  %v1060 = vsel %vm1059, 1, 0
  %v1061 = vadd.s32 %v1051, %v1055
  %v1062 = vadd.s32 %v1054, %v1060
  %vm1063 = vc.u32 %v1061, %v1057
  %v1064 = vsel %vm1063, 1, 0
  %v1065 = vadd.s32 %v1061, %v1057
  %v1066 = vadd.s32 %v1062, %v1064
  %v1067 = vadd.s32 %v1066, %v1056
  %v1068 = vadd.s32 %v1067, %v1058
  %v1069 = vand.u32 %v1046, 65535
  %v1070 = vshrl.u32 %v1046, 16
  %v1071 = vand.u32 %v1041, 65535
  %v1072 = vshrl.u32 %v1041, 16
  %v1073 = vmul.u32 %v1069, %v1071
  %v1074 = vmul.u32 %v1069, %v1072
  %v1075 = vmul.u32 %v1070, %v1071
  %v1076 = vmul.u32 %v1070, %v1072
  %v1077 = vshll.u32 %v1074, 16
  %v1078 = vshrl.u32 %v1074, 16
  %v1079 = vshll.u32 %v1075, 16
  %v1080 = vshrl.u32 %v1075, 16
  %vm1081 = vc.u32 %v1073, %v1077
  %v1082 = vsel %vm1081, 1, 0
  %v1083 = vadd.s32 %v1073, %v1077
  %v1084 = vadd.s32 %v1076, %v1082
  %vm1085 = vc.u32 %v1083, %v1079
  %v1086 = vsel %vm1085, 1, 0
  %v1087 = vadd.s32 %v1083, %v1079
  %v1088 = vadd.s32 %v1084, %v1086
  %v1089 = vadd.s32 %v1088, %v1078
  %v1090 = vadd.s32 %v1089, %v1080
  %v1091 = vmul.u32 %v1046, %v1037
  %v1092 = vadd.s32 %v1068, %v1087
  %vm1093 = vc.u32 %v1068, %v1087
  %v1094 = vadd.s32 %v1090, 1
  %v1095 = vsel %vm1093, %v1094, %v1090
  %v1096 = vadd.s32 %v1091, %v1095
  %v1097 = vadd.s32 %v1096, 536870912
  %v1098 = vshrl.u32 %v1097, 30
  %v1099 = vshll.u32 %v1098, 30
  %v1100 = vsub.s32 %v1096, %v1099
  %vm1101 = vcmp.lt.s32.totalorder %v1100, 0
  %v1102 = vsub.s32 0, %v1100
  %v1103 = vsel %vm1101, %v1102, %v1100
  %v1104 = vclz %v1103
  %v1105 = vsub.s32 %v1104, 2
  %vm1106 = vcmp.gt.s32.totalorder 0, %v1105
  %v1107 = vsel %vm1106, 0, %v1105
  %v1108 = vsub.s32 32, %v1107
  %v1109 = vshll.u32 %v1100, %v1107
  %v1110 = vshrl.u32 %v1092, %v1108
  %v1111 = vor.u32 %v1109, %v1110
  %v1112 = vsub.s32 4294967266, %v1107
  %v1113 = vadd.s32 %v1112, 127
  %v1114 = vshll.u32 %v1113, 23
  %v1115 = vor.u32 4788187, %v1114
  %v1116 = vand.u32 2147483647, %v1115
  %v1118 = vcvt.s32.f32 %v1111
  %v1119 = vmul.f32 %v1118, %v1116
  %v1120 = vxor.u32 %v1119, 2147483648
  %v1121 = vsel %vm1000, %v1120, %v1119
  %v1122 = vsub.s32 4, %v1098
  %v1123 = vsel %vm1000, %v1122, %v1098
  %v1124 = vsel %vm999, %v796, %v1121
  %v1125 = vsel %vm999, 0, %v1123
  %v1126 = vmul.f32 %v1124, %v1124
  %v1127 = vmul.f32 %v1126, -0.001358992
  %v1128 = vadd.f32 %v1127, 0.041655596
  %v1129 = vmul.f32 %v1126, %v1128
  %v1130 = vadd.f32 %v1129, -0.4999988
  %v1131 = vmul.f32 %v1126, %v1130
  %v1132 = vadd.f32 1.0, %v1131
  %v1133 = vmul.f32 %v1124, %v1124
  %v1134 = vmul.f32 %v1133, -0.00019511016
  %v1135 = vadd.f32 %v1134, 0.008332121
  %v1136 = vmul.f32 %v1133, %v1135
  %v1137 = vadd.f32 %v1136, -0.16666654
  %v1138 = vmul.f32 %v1133, %v1137
  %v1139 = vadd.f32 %v1138, 1.0
  %v1140 = vmul.f32 %v1139, %v1124
  %vm1141 = vweird.f32 %v796
  %v1142 = vadd.s32 %v1125, 3
  %v1143 = vand.u32 %v1142, 3
  %vm1144 = vcmp.lt.s32.totalorder %v1143, 2
  %vm1145 = vcmp.eq.s32.totalorder %v1143, 0
  %v1146 = vxor.u32 %v1140, 2147483648
  %v1147 = vsel %vm1145, %v1132, %v1146
  %vm1148 = vcmp.eq.s32.totalorder %v1143, 2
  %v1149 = vxor.u32 %v1132, 2147483648
  %v1150 = vsel %vm1148, %v1149, %v1140
  %v1151 = vsel %vm1144, %v1147, %v1150
  %v1152 = vsel %vm1141, nan, %v1151
  %1153 = vrot.lane.b32.xlu0 %v798, 100
  %v1154 = vpop.permute.xlu0 %1153
  %v1155 = vsel %vm23, %v1154, 0
  %v1158 = vsel %vm26, %v1152, 0
  %1160 = vmatpush.msra.mxu0 0.0
  %1161 = vmatpush.msra.mxu0 0.0
  %1162 = vmatpush.msra.mxu0 0.0
  %1163 = vmatpush.msra.mxu0 0.0
  %1164 = vmatpush.msra.mxu0 0.0
  %1165 = vmatpush.msra.mxu0 0.0
  %1166 = vmatpush.msra.mxu0 0.0
  %1167 = vmatpush.msra.mxu0 0.0
  %1168 = vmatpush.msra.mxu0 0.0
  %1169 = vmatpush.msra.mxu0 0.0
  %1170 = vmatpush.msra.mxu0 0.0
  %1171 = vmatpush.msra.mxu0 0.0
  %1172 = vmatpush.msra.mxu0 0.0
  %1173 = vmatpush.msra.mxu0 0.0
  %1174 = vmatpush.msra.mxu0 0.0
  %1175 = vmatpush.msra.mxu0 %v1158
  %1176 = vmatmul.f32.gmra.mxu0 %v1155
  %v1177 = vpop.f32.mrf.mxu0
  %v1178 = vadd.f32 0.0, %v1177
  %1179 = vdwg.mxu0
  %v1180 = vadd.f32 %v997, %v1178
  %v1181 = vadd.f32 %v796, %v1180
  %s1182 = scalar_lea.vmem %s3, 16
  %1183 = vst [vmem:[%s1182] sm:$0x3f] %v1181
  %s1184 = scalar_lea.vmem %s2, 24
  %v1185 = vld [vmem:[%s1184] sm:$0x3f]
  %s1186 = scalar_lea.vmem %s0, 24
  %v1187 = vld [vmem:[%s1186] sm:$0x3f]
  %1189 = vset.pattern.permute.xlu0 0
  %1190 = vperm.xlu0 %1189, %v1187
  %v1191 = vpop.permute.xlu0 %1190
  %1193 = vrot.lane.b32.xlu0 %v1187, 127
  %v1194 = vpop.permute.xlu0 %1193
  %v1195 = vsel %vm23, %v1194, 0
  %v1198 = vsel %vm26, %v1185, 0
  %1200 = vmatpush.msra.mxu0 0.0
  %1201 = vmatpush.msra.mxu0 0.0
  %1202 = vmatpush.msra.mxu0 0.0
  %1203 = vmatpush.msra.mxu0 0.0
  %1204 = vmatpush.msra.mxu0 0.0
  %1205 = vmatpush.msra.mxu0 0.0
  %1206 = vmatpush.msra.mxu0 0.0
  %1207 = vmatpush.msra.mxu0 0.0
  %1208 = vmatpush.msra.mxu0 0.0
  %1209 = vmatpush.msra.mxu0 0.0
  %1210 = vmatpush.msra.mxu0 0.0
  %1211 = vmatpush.msra.mxu0 0.0
  %1212 = vmatpush.msra.mxu0 0.0
  %1213 = vmatpush.msra.mxu0 0.0
  %1214 = vmatpush.msra.mxu0 0.0
  %1215 = vmatpush.msra.mxu0 %v1198
  %1216 = vmatmul.f32.gmra.mxu0 %v1195
  %v1217 = vpop.f32.mrf.mxu0
  %v1218 = vadd.f32 0.0, %v1217
  %1219 = vdwg.mxu0
  %v1220 = vadd.f32 %v1191, %v1218
  %v1221 = vld [vmem:[%s1] sm:$0xff]
  %v1222 = vld [vmem:[%s1 + $0x8] sm:$0xff]
  %v1224 = vsel %vm23, %v1221, 0
  %v1227 = vsel %vm23, %v1222, 0
  %1229 = vmatpush.msra.mxu0 0.0
  %1230 = vmatpush.msra.mxu0 0.0
  %1231 = vmatpush.msra.mxu0 0.0
  %1232 = vmatpush.msra.mxu0 0.0
  %1233 = vmatpush.msra.mxu0 0.0
  %1234 = vmatpush.msra.mxu0 0.0
  %1235 = vmatpush.msra.mxu0 0.0
  %1236 = vmatpush.msra.mxu0 0.0
  %1237 = vmatpush.msra.mxu0 0.0
  %1238 = vmatpush.msra.mxu0 0.0
  %1239 = vmatpush.msra.mxu0 0.0
  %1240 = vmatpush.msra.mxu0 0.0
  %1241 = vmatpush.msra.mxu0 0.0
  %1242 = vmatpush.msra.mxu0 0.0
  %1243 = vmatpush.msra.mxu0 0.0
  %1244 = vmatpush.msra.mxu0 %v1198
  %1245 = vmatmul.f32.gmra.mxu0 %v1224
  %v1246 = vpop.f32.mrf.mxu0
  %v1247 = vadd.f32 0.0, %v1246
  %1248 = vmatmul.f32.gmra.mxu0 %v1227
  %v1249 = vpop.f32.mrf.mxu0
  %v1250 = vadd.f32 0.0, %v1249
  %1251 = vdwg.mxu0
  %v1252 = vld [vmem:[%s82] sm:$0xff]
  %v1253 = vld [vmem:[%s82 + $0x8] sm:$0xff]
  %v1255 = vsel %vm23, %v1252, 0
  %v1258 = vsel %vm23, %v1253, 0
  %1260 = vmatpush.msra.mxu0 0.0
  %1261 = vmatpush.msra.mxu0 0.0
  %1262 = vmatpush.msra.mxu0 0.0
  %1263 = vmatpush.msra.mxu0 0.0
  %1264 = vmatpush.msra.mxu0 0.0
  %1265 = vmatpush.msra.mxu0 0.0
  %1266 = vmatpush.msra.mxu0 0.0
  %1267 = vmatpush.msra.mxu0 0.0
  %1268 = vmatpush.msra.mxu0 0.0
  %1269 = vmatpush.msra.mxu0 0.0
  %1270 = vmatpush.msra.mxu0 0.0
  %1271 = vmatpush.msra.mxu0 0.0
  %1272 = vmatpush.msra.mxu0 0.0
  %1273 = vmatpush.msra.mxu0 0.0
  %1274 = vmatpush.msra.mxu0 0.0
  %1275 = vmatpush.msra.mxu0 %v1198
  %1276 = vmatmul.f32.gmra.mxu0 %v1255
  %v1277 = vpop.f32.mrf.mxu0
  %v1278 = vadd.f32 0.0, %v1277
  %1279 = vmatmul.f32.gmra.mxu0 %v1258
  %v1280 = vpop.f32.mrf.mxu0
  %v1281 = vadd.f32 0.0, %v1280
  %1282 = vdwg.mxu0
  %v1283 = vmul.f32 %v1247, %v1278
  %v1284 = vmul.f32 %v1250, %v1281
  %1285 = vrot.lane.b32.xlu0 %v1187, 121
  %v1286 = vpop.permute.xlu0 %1285
  %v1287 = vsel %vm118, %v1286, 0
  %1289 = vmatpush.msra.mxu0 0.0
  %1290 = vmatpush.msra.mxu0 0.0
  %1291 = vmatpush.msra.mxu0 0.0
  %1292 = vmatpush.msra.mxu0 0.0
  %1293 = vmatpush.msra.mxu0 0.0
  %1294 = vmatpush.msra.mxu0 0.0
  %1295 = vmatpush.msra.mxu0 0.0
  %1296 = vmatpush.msra.mxu0 0.0
  %1297 = vmatpush.msra.mxu0 0.0
  %1298 = vmatpush.msra.mxu0 0.0
  %1299 = vmatpush.msra.mxu0 0.0
  %1300 = vmatpush.msra.mxu0 0.0
  %1301 = vmatpush.msra.mxu0 0.0
  %1302 = vmatpush.msra.mxu0 0.0
  %1303 = vmatpush.msra.mxu0 %v1284
  %1304 = vmatpush.msra.mxu0 %v1283
  %1305 = vmatmul.f32.gmra.mxu0 %v1287
  %v1306 = vpop.f32.mrf.mxu0
  %v1307 = vadd.f32 0.0, %v1306
  %1308 = vdwg.mxu0
  %v1309 = vadd.f32 %v1220, %v1307
  %v1310 = vld [vmem:[%s1 + $0x10] sm:$0x1f]
  %v1312 = vsel %vm23, %v1310, 0
  %1314 = vmatpush.msra.mxu0 0.0
  %1315 = vmatpush.msra.mxu0 0.0
  %1316 = vmatpush.msra.mxu0 0.0
  %1317 = vmatpush.msra.mxu0 0.0
  %1318 = vmatpush.msra.mxu0 0.0
  %1319 = vmatpush.msra.mxu0 0.0
  %1320 = vmatpush.msra.mxu0 0.0
  %1321 = vmatpush.msra.mxu0 0.0
  %1322 = vmatpush.msra.mxu0 0.0
  %1323 = vmatpush.msra.mxu0 0.0
  %1324 = vmatpush.msra.mxu0 0.0
  %1325 = vmatpush.msra.mxu0 0.0
  %1326 = vmatpush.msra.mxu0 0.0
  %1327 = vmatpush.msra.mxu0 0.0
  %1328 = vmatpush.msra.mxu0 0.0
  %1329 = vmatpush.msra.mxu0 %v1198
  %1330 = vmatmul.f32.gmra.mxu0 %v1312
  %v1331 = vpop.f32.mrf.mxu0
  %v1332 = vadd.f32 0.0, %v1331
  %1333 = vdwg.mxu0
  %v1334 = vld [vmem:[%s82 + $0x10] sm:$0x1f]
  %v1336 = vsel %vm23, %v1334, 0
  %1338 = vmatpush.msra.mxu0 0.0
  %1339 = vmatpush.msra.mxu0 0.0
  %1340 = vmatpush.msra.mxu0 0.0
  %1341 = vmatpush.msra.mxu0 0.0
  %1342 = vmatpush.msra.mxu0 0.0
  %1343 = vmatpush.msra.mxu0 0.0
  %1344 = vmatpush.msra.mxu0 0.0
  %1345 = vmatpush.msra.mxu0 0.0
  %1346 = vmatpush.msra.mxu0 0.0
  %1347 = vmatpush.msra.mxu0 0.0
  %1348 = vmatpush.msra.mxu0 0.0
  %1349 = vmatpush.msra.mxu0 0.0
  %1350 = vmatpush.msra.mxu0 0.0
  %1351 = vmatpush.msra.mxu0 0.0
  %1352 = vmatpush.msra.mxu0 0.0
  %1353 = vmatpush.msra.mxu0 %v1198
  %1354 = vmatmul.f32.gmra.mxu0 %v1336
  %v1355 = vpop.f32.mrf.mxu0
  %v1356 = vadd.f32 0.0, %v1355
  %1357 = vdwg.mxu0
  %v1358 = vmul.f32 %v1332, %v1356
  %1359 = vrot.lane.b32.xlu0 %v1187, 105
  %v1360 = vpop.permute.xlu0 %1359
  %v1361 = vsel %vm193, %v1360, 0
  %v1364 = vsel %vm196, %v1358, 0
  %1366 = vmatpush.msra.mxu0 0.0
  %1367 = vmatpush.msra.mxu0 0.0
  %1368 = vmatpush.msra.mxu0 0.0
  %1369 = vmatpush.msra.mxu0 0.0
  %1370 = vmatpush.msra.mxu0 0.0
  %1371 = vmatpush.msra.mxu0 0.0
  %1372 = vmatpush.msra.mxu0 0.0
  %1373 = vmatpush.msra.mxu0 0.0
  %1374 = vmatpush.msra.mxu0 0.0
  %1375 = vmatpush.msra.mxu0 0.0
  %1376 = vmatpush.msra.mxu0 0.0
  %1377 = vmatpush.msra.mxu0 0.0
  %1378 = vmatpush.msra.mxu0 0.0
  %1379 = vmatpush.msra.mxu0 0.0
  %1380 = vmatpush.msra.mxu0 0.0
  %1381 = vmatpush.msra.mxu0 %v1364
  %1382 = vmatmul.f32.gmra.mxu0 %v1361
  %v1383 = vpop.f32.mrf.mxu0
  %v1384 = vadd.f32 0.0, %v1383
  %1385 = vdwg.mxu0
  %v1386 = vadd.f32 %v1309, %v1384
  %v1387 = vand.u32 2147483647, %v1185
  %vm1388 = vcmp.le.f32.partialorder %v1387, 0.7853982
  %vm1389 = vcmp.lt.s32.totalorder %v1185, 0
  %v1390 = vand.u32 %v1185, 2139095040
  %v1391 = vshrl.u32 %v1390, 23
  %v1392 = vsub.s32 %v1391, 127
  %v1393 = vand.u32 2147483647, %v1185
  %v1394 = vand.u32 %v1393, 8388607
  %v1395 = vor.u32 %v1394, 8388608
  %v1396 = vsub.s32 0, %v1395
  %v1397 = vadd.s32 %v1392, 1
  %vm1398 = vcmp.gt.s32.totalorder %v1397, 0
  %v1399 = vsel %vm1398, %v1397, 0
  %v1400 = vshrl.u32 %v1399, 5
  %v1401 = vand.u32 %v1399, 31
  %v1402 = vsub.s32 32, %v1401
  %v1403 = vshrl.u32 683565275, %v1402
  %v1404 = vshll.u32 683565275, %v1401
  %v1405 = vshrl.u32 2475754826, %v1402
  %v1406 = vor.u32 %v1404, %v1405
  %v1407 = vshll.u32 2475754826, %v1401
  %v1408 = vshrl.u32 2131351028, %v1402
  %v1409 = vor.u32 %v1407, %v1408
  %v1410 = vshll.u32 2131351028, %v1401
  %v1411 = vshrl.u32 2102212464, %v1402
  %v1412 = vor.u32 %v1410, %v1411
  %v1413 = vshll.u32 2102212464, %v1401
  %v1414 = vshrl.u32 920167782, %v1402
  %v1415 = vor.u32 %v1413, %v1414
  %v1416 = vshll.u32 920167782, %v1401
  %v1417 = vshrl.u32 1326507024, %v1402
  %v1418 = vor.u32 %v1416, %v1417
  %vm1419 = vcmp.lt.s32.totalorder %v1400, 1
  %vm1420 = vcmp.lt.s32.totalorder %v1400, 2
  %vm1421 = vcmp.lt.s32.totalorder %v1400, 3
  %vm1422 = vcmp.lt.s32.totalorder %v1400, 4
  %v1423 = vsel %vm1419, %v1403, %v1406
  %v1424 = vsel %vm1422, %v1412, 2102212464
  %v1425 = vsel %vm1421, %v1409, %v1424
  %v1426 = vsel %vm1420, %v1423, %v1425
  %v1427 = vsel %vm1419, %v1406, %v1409
  %v1428 = vsel %vm1422, %v1415, 920167782
  %v1429 = vsel %vm1421, %v1412, %v1428
  %v1430 = vsel %vm1420, %v1427, %v1429
  %v1431 = vsel %vm1419, %v1409, %v1412
  %v1432 = vsel %vm1422, %v1418, 1326507024
  %v1433 = vsel %vm1421, %v1415, %v1432
  %v1434 = vsel %vm1420, %v1431, %v1433
  %v1435 = vshll.u32 %v1395, 8
  %v1436 = vand.u32 %v1435, 65535
  %v1437 = vshrl.u32 %v1435, 16
  %v1438 = vand.u32 %v1434, 65535
  %v1439 = vshrl.u32 %v1434, 16
  %v1440 = vmul.u32 %v1436, %v1438
  %v1441 = vmul.u32 %v1436, %v1439
  %v1442 = vmul.u32 %v1437, %v1438
  %v1443 = vmul.u32 %v1437, %v1439
  %v1444 = vshll.u32 %v1441, 16
  %v1445 = vshrl.u32 %v1441, 16
  %v1446 = vshll.u32 %v1442, 16
  %v1447 = vshrl.u32 %v1442, 16
  %vm1448 = vc.u32 %v1440, %v1444
  %v1449 = vsel %vm1448, 1, 0
  %v1450 = vadd.s32 %v1440, %v1444
  %v1451 = vadd.s32 %v1443, %v1449
  %vm1452 = vc.u32 %v1450, %v1446
  %v1453 = vsel %vm1452, 1, 0
  %v1454 = vadd.s32 %v1450, %v1446
  %v1455 = vadd.s32 %v1451, %v1453
  %v1456 = vadd.s32 %v1455, %v1445
  %v1457 = vadd.s32 %v1456, %v1447
  %v1458 = vand.u32 %v1435, 65535
  %v1459 = vshrl.u32 %v1435, 16
  %v1460 = vand.u32 %v1430, 65535
  %v1461 = vshrl.u32 %v1430, 16
  %v1462 = vmul.u32 %v1458, %v1460
  %v1463 = vmul.u32 %v1458, %v1461
  %v1464 = vmul.u32 %v1459, %v1460
  %v1465 = vmul.u32 %v1459, %v1461
  %v1466 = vshll.u32 %v1463, 16
  %v1467 = vshrl.u32 %v1463, 16
  %v1468 = vshll.u32 %v1464, 16
  %v1469 = vshrl.u32 %v1464, 16
  %vm1470 = vc.u32 %v1462, %v1466
  %v1471 = vsel %vm1470, 1, 0
  %v1472 = vadd.s32 %v1462, %v1466
  %v1473 = vadd.s32 %v1465, %v1471
  %vm1474 = vc.u32 %v1472, %v1468
  %v1475 = vsel %vm1474, 1, 0
  %v1476 = vadd.s32 %v1472, %v1468
  %v1477 = vadd.s32 %v1473, %v1475
  %v1478 = vadd.s32 %v1477, %v1467
  %v1479 = vadd.s32 %v1478, %v1469
  %v1480 = vmul.u32 %v1435, %v1426
  %v1481 = vadd.s32 %v1457, %v1476
  %vm1482 = vc.u32 %v1457, %v1476
  %v1483 = vadd.s32 %v1479, 1
  %v1484 = vsel %vm1482, %v1483, %v1479
  %v1485 = vadd.s32 %v1480, %v1484
  %v1486 = vadd.s32 %v1485, 536870912
  %v1487 = vshrl.u32 %v1486, 30
  %v1488 = vshll.u32 %v1487, 30
  %v1489 = vsub.s32 %v1485, %v1488
  %vm1490 = vcmp.lt.s32.totalorder %v1489, 0
  %v1491 = vsub.s32 0, %v1489
  %v1492 = vsel %vm1490, %v1491, %v1489
  %v1493 = vclz %v1492
  %v1494 = vsub.s32 %v1493, 2
  %vm1495 = vcmp.gt.s32.totalorder 0, %v1494
  %v1496 = vsel %vm1495, 0, %v1494
  %v1497 = vsub.s32 32, %v1496
  %v1498 = vshll.u32 %v1489, %v1496
  %v1499 = vshrl.u32 %v1481, %v1497
  %v1500 = vor.u32 %v1498, %v1499
  %v1501 = vsub.s32 4294967266, %v1496
  %v1502 = vadd.s32 %v1501, 127
  %v1503 = vshll.u32 %v1502, 23
  %v1504 = vor.u32 4788187, %v1503
  %v1505 = vand.u32 2147483647, %v1504
  %v1507 = vcvt.s32.f32 %v1500
  %v1508 = vmul.f32 %v1507, %v1505
  %v1509 = vxor.u32 %v1508, 2147483648
  %v1510 = vsel %vm1389, %v1509, %v1508
  %v1511 = vsub.s32 4, %v1487
  %v1512 = vsel %vm1389, %v1511, %v1487
  %v1513 = vsel %vm1388, %v1185, %v1510
  %v1514 = vsel %vm1388, 0, %v1512
  %v1515 = vmul.f32 %v1513, %v1513
  %v1516 = vmul.f32 %v1515, -0.001358992
  %v1517 = vadd.f32 %v1516, 0.041655596
  %v1518 = vmul.f32 %v1515, %v1517
  %v1519 = vadd.f32 %v1518, -0.4999988
  %v1520 = vmul.f32 %v1515, %v1519
  %v1521 = vadd.f32 1.0, %v1520
  %v1522 = vmul.f32 %v1513, %v1513
  %v1523 = vmul.f32 %v1522, -0.00019511016
  %v1524 = vadd.f32 %v1523, 0.008332121
  %v1525 = vmul.f32 %v1522, %v1524
  %v1526 = vadd.f32 %v1525, -0.16666654
  %v1527 = vmul.f32 %v1522, %v1526
  %v1528 = vadd.f32 %v1527, 1.0
  %v1529 = vmul.f32 %v1528, %v1513
  %vm1530 = vweird.f32 %v1185
  %v1531 = vadd.s32 %v1514, 3
  %v1532 = vand.u32 %v1531, 3
  %vm1533 = vcmp.lt.s32.totalorder %v1532, 2
  %vm1534 = vcmp.eq.s32.totalorder %v1532, 0
  %v1535 = vxor.u32 %v1529, 2147483648
  %v1536 = vsel %vm1534, %v1521, %v1535
  %vm1537 = vcmp.eq.s32.totalorder %v1532, 2
  %v1538 = vxor.u32 %v1521, 2147483648
  %v1539 = vsel %vm1537, %v1538, %v1529
  %v1540 = vsel %vm1533, %v1536, %v1539
  %v1541 = vsel %vm1530, nan, %v1540
  %1542 = vrot.lane.b32.xlu0 %v1187, 100
  %v1543 = vpop.permute.xlu0 %1542
  %v1544 = vsel %vm23, %v1543, 0
  %v1547 = vsel %vm26, %v1541, 0
  %1549 = vmatpush.msra.mxu0 0.0
  %1550 = vmatpush.msra.mxu0 0.0
  %1551 = vmatpush.msra.mxu0 0.0
  %1552 = vmatpush.msra.mxu0 0.0
  %1553 = vmatpush.msra.mxu0 0.0
  %1554 = vmatpush.msra.mxu0 0.0
  %1555 = vmatpush.msra.mxu0 0.0
  %1556 = vmatpush.msra.mxu0 0.0
  %1557 = vmatpush.msra.mxu0 0.0
  %1558 = vmatpush.msra.mxu0 0.0
  %1559 = vmatpush.msra.mxu0 0.0
  %1560 = vmatpush.msra.mxu0 0.0
  %1561 = vmatpush.msra.mxu0 0.0
  %1562 = vmatpush.msra.mxu0 0.0
  %1563 = vmatpush.msra.mxu0 0.0
  %1564 = vmatpush.msra.mxu0 %v1547
  %1565 = vmatmul.f32.gmra.mxu0 %v1544
  %v1566 = vpop.f32.mrf.mxu0
  %v1567 = vadd.f32 0.0, %v1566
  %1568 = vdwg.mxu0
  %v1569 = vadd.f32 %v1386, %v1567
  %v1570 = vadd.f32 %v1185, %v1569
  %s1571 = scalar_lea.vmem %s3, 24
  %1572 = vst [vmem:[%s1571] sm:$0x3f] %v1570
  // Predicated region
  $region14: #{tpu_custom_call.1} parent=0 // pred_check
    _
  $region15: #{tpu_custom_call.1} parent=0 // pred_check_branch
    %1574 = sbr.rel (0) target = $region17
  $region16: #{tpu_custom_call.1} parent=0 // pred_region
    _
  $region17: #{tpu_custom_call.1} parent=0 // pred_fallthru
    _
  // Predicated region
  $region18: #{tpu_custom_call.1} parent=0 // pred_check
    _
  $region19: #{tpu_custom_call.1} parent=0 // pred_check_branch
    %1576 = sbr.rel (0) target = $region21
  $region20: #{tpu_custom_call.1} parent=0 // pred_region
    _
  $region21: #{tpu_custom_call.1} parent=0 // pred_fallthru
    _

</llo_original>
